<compile_context>
chip_gen: v6e
topology: v6e:2x2x1
jax: 0.10.0
libtpu: 0.0.40
codegen_flags: <defaults>
</compile_context>

<pallas_src>
import jax
import jax.numpy as jnp
from jax import lax
from jax.experimental import pallas as pl
from jax.experimental.pallas import tpu as pltpu

# ------------------------- small, TPU-friendly sizes -------------------------
VOCAB = 256      # vocab_size    (BART's 50265 in the original; small here)
EMB   = 128      # embedding_dim (256 in the original)
HID   = 128      # hidden_dim    (512 in the original)
B     = 8        # batch
T     = 8        # padded sequence length
HEADP = 128      # lane-padded width of the fused critic column block


# ----------------------------- Pallas kernel --------------------------------
def lstm_actor_critic_kernel(lmax_ref,    # SMEM (1,)        int32
                             ids_ref,     # VMEM (T*B, 1)    int32  time-major ids
                             mask_ref,    # VMEM (B, 1)      f32
                             win_ref,     # VMEM (V, 4H)     bf16   fused E @ W_ih
                             whh_ref,     # VMEM (H, 4H)     bf16
                             b_ref,       # VMEM (1, 4H)     f32
                             whead_ref,   # VMEM (H, V+128)  bf16   [W_actor | critic col]
                             bhead_ref,   # VMEM (1, V+128)  f32
                             actor_ref,   # VMEM (B, V)      f32 out
                             critic_ref,  # VMEM (B, 1)      f32 out
                             gx_ref):     # VMEM (T*B, 4H)   f32 scratch
    TB = ids_ref.shape[0]
    Vin = win_ref.shape[0]
    H = whh_ref.shape[0]
    V = actor_ref.shape[1]
    B_ = mask_ref.shape[0]
    nsteps = TB // B_                      # static, == T
    lmax = lmax_ref[0]

    # ---- in-kernel "embedding gather": one-hot(x) @ (E @ W_ih) + b ----------
    # Each one-hot row holds a single 1.0, so the f32-accumulated matmul picks
    # the bf16 fused row exactly == Embedding(x) @ W_ih.
    cols = lax.broadcasted_iota(jnp.int32, (TB, Vin), 1)
    one_hot = (cols == ids_ref[...]).astype(jnp.bfloat16)              # (T*B, V)
    gx_ref[...] = (jnp.dot(one_hot, win_ref[...],
                           preferred_element_type=jnp.float32)
                   + b_ref[...])                                       # (T*B, 4H) f32

    whh = whh_ref[...]                                                 # (H, 4H) bf16

    def sigm(z):                         # sigmoid as a single EUP tanh op
        return 0.5 * jnp.tanh(0.5 * z) + 0.5

    # ---- statically unrolled recurrence (the serial critical path) ----------
    # Fully unrolled so Mosaic keeps the loop-invariant W_hh push hoisted and
    # overlaps adjacent step bodies.  (Hand-driving pltpu.matmul_push_rhs /
    # matmul_acc_lhs / matmul_pop is a further option if a bundle dump ever
    # shows a per-step weight re-push.)
    h = jnp.zeros((B_, H), jnp.float32)
    c = jnp.zeros((B_, H), jnp.float32)
    for t in range(nsteps):
        gates = (gx_ref[t * B_:(t + 1) * B_, :]
                 + jnp.dot(h.astype(jnp.bfloat16), whh,
                           preferred_element_type=jnp.float32))        # (B, 4H) f32
        i_g = sigm(gates[:, 0:H])
        f_g = sigm(gates[:, H:2 * H])
        g_g = jnp.tanh(gates[:, 2 * H:3 * H])
        o_g = sigm(gates[:, 3 * H:4 * H])
        c_new = f_g * c + i_g * g_g
        h_new = o_g * jnp.tanh(c_new)
        # Only advance state while t < lmax: after the loop h == h_{lmax-1}.
        # Two (8,128) selects per step ride in otherwise-idle VPU slots.
        upd = t < lmax
        h = jnp.where(upd, h_new, h)
        c = jnp.where(upd, c_new, c)

    # pad_packed_sequence zeros rows whose length < Lmax
    h_sel = h * mask_ref[...]                                          # (B, H) f32

    # ---- fused actor + critic head: one (B,H)@(H,V+128) MXU pass ------------
    logits_all = (jnp.dot(h_sel.astype(jnp.bfloat16), whead_ref[...],
                          preferred_element_type=jnp.float32)
                  + bhead_ref[...])                                    # (B, V+128)
    logits = logits_all[:, :V]
    m = jnp.max(logits, axis=-1, keepdims=True)
    e = jnp.exp(logits - m)
    # approx recip: rows sum to 1 within ~1e-3; switch to approx=False if
    # downstream needs exactly-normalized probabilities.
    inv = pl.reciprocal(jnp.sum(e, axis=-1, keepdims=True), approx=True)
    actor_ref[...] = e * inv
    critic_ref[...] = logits_all[:, V:V + 1]                           # fused critic col


# --------------------- one-time weight prep (hoisted) ------------------------
def prepare_params(params):
    """Off-the-forward-path weight preparation; run once and reuse."""
    # Fuse Embedding with the LSTM input projection: W_in = E @ W_ih  (V, 4H).
    w_in = jnp.dot(params["embedding"], params["w_ih"],
                   precision="highest").astype(jnp.bfloat16)
    w_hh = params["w_hh"].astype(jnp.bfloat16)
    # Fused head: [ W_actor (H,V) | 128-lane-padded critic column ]
    w_crit = jnp.zeros((HID, HEADP), jnp.float32).at[:, 0].set(params["w_critic"][0])
    w_head = jnp.concatenate([params["w_actor"], w_crit], axis=1).astype(jnp.bfloat16)
    b_crit = jnp.zeros((1, HEADP), jnp.float32).at[0, 0].set(params["b_critic"][0, 0])
    b_head = jnp.concatenate([params["b_actor"], b_crit], axis=1)      # (1, V+128)
    return {"w_in": w_in, "w_hh": w_hh, "b": params["b"],
            "w_head": w_head, "b_head": b_head}


# ------------------------------ forward wrapper -------------------------------
@jax.jit
def lstm_actor_critic(x, lengths, prep):
    """x: (B, T) int32 token ids, lengths: (B,) int32, prep: prepare_params(...)."""
    lengths = lengths.astype(jnp.int32)
    lmax = jnp.minimum(jnp.max(lengths), T).astype(jnp.int32)   # pad_packed truncation
    mask = (lengths == lmax).astype(jnp.float32)[:, None]       # (B, 1)
    ids = x.T.astype(jnp.int32).reshape(T * B, 1)               # time-major token ids

    vmem = pl.BlockSpec(memory_space=pltpu.MemorySpace.VMEM)
    smem = pl.BlockSpec(memory_space=pltpu.MemorySpace.SMEM)

    actor, critic = pl.pallas_call(
        lstm_actor_critic_kernel,
        out_shape=(jax.ShapeDtypeStruct((B, VOCAB), jnp.float32),
                   jax.ShapeDtypeStruct((B, 1), jnp.float32)),
        in_specs=[smem, vmem, vmem, vmem, vmem, vmem, vmem, vmem],
        out_specs=(vmem, vmem),
        scratch_shapes=[pltpu.VMEM((T * B, 4 * HID), jnp.float32)],
    )(lmax.reshape(1), ids, mask, prep["w_in"], prep["w_hh"], prep["b"],
      prep["w_head"], prep["b_head"])
    return actor, critic


# --------------------------- pure-JAX reference -------------------------------
def reference(x, lengths, params):
    # The kernel consumes bf16 MXU operands, so verify against the same
    # bf16-quantized effective weights (incl. the fused E @ W_ih input
    # projection, which equals Embedding(x) @ W_ih exactly in exact
    # arithmetic) with f32 math, so only activation rounding and accumulation
    # order differ.
    def q(w):
        return w.astype(jnp.bfloat16).astype(jnp.float32)

    w_in = q(jnp.dot(params["embedding"], params["w_ih"], precision="highest"))
    w_hh = q(params["w_hh"])
    w_a, w_c = q(params["w_actor"]), q(params["w_critic"])
    lengths = lengths.astype(jnp.int32)
    lmax = jnp.minimum(jnp.max(lengths), T)

    gx = jnp.take(w_in, x, axis=0)        # (B, T, 4H) == Embedding(x) @ W_ih
    h = jnp.zeros((B, HID), jnp.float32)
    c = jnp.zeros((B, HID), jnp.float32)
    h_last = jnp.zeros((B, HID), jnp.float32)
    for t in range(T):
        gates = gx[:, t] + jnp.dot(h, w_hh, precision="highest") + params["b"]
        i_g = jax.nn.sigmoid(gates[:, 0:HID])
        f_g = jax.nn.sigmoid(gates[:, HID:2 * HID])
        g_g = jnp.tanh(gates[:, 2 * HID:3 * HID])
        o_g = jax.nn.sigmoid(gates[:, 3 * HID:4 * HID])
        c = f_g * c + i_g * g_g
        h = o_g * jnp.tanh(c)
        h_last = jnp.where(t == lmax - 1, h, h_last)
    mask = (lengths == lmax).astype(jnp.float32)[:, None]
    h_sel = h_last * mask
    logits = jnp.dot(h_sel, w_a, precision="highest") + params["b_actor"]
    actor = jax.nn.softmax(logits, axis=-1)
    critic = jnp.sum(h_sel * w_c, axis=-1, keepdims=True) + params["b_critic"]
    return actor, critic


# ------------------------------ parameters ------------------------------------
def init_params(key):
    ks = jax.random.split(key, 8)
    s_emb = 0.1
    s_ih = 1.0 / jnp.sqrt(EMB)
    s_hh = 1.0 / jnp.sqrt(HID)
    return {
        "embedding": jax.random.normal(ks[0], (VOCAB, EMB), jnp.float32) * s_emb,
        # LSTM weights, gate order [i | f | g | o]; bias = b_ih + b_hh combined.
        "w_ih": jax.random.normal(ks[1], (EMB, 4 * HID), jnp.float32) * s_ih,
        "w_hh": jax.random.normal(ks[2], (HID, 4 * HID), jnp.float32) * s_hh,
        "b":    jax.random.normal(ks[3], (1, 4 * HID), jnp.float32) * 0.05,
        "w_actor": jax.random.normal(ks[4], (HID, VOCAB), jnp.float32) * s_hh,
        "b_actor": jax.random.normal(ks[5], (1, VOCAB), jnp.float32) * 0.05,
        "w_critic": jax.random.normal(ks[6], (1, HID), jnp.float32) * s_hh,
        "b_critic": jax.random.normal(ks[7], (1, 1), jnp.float32) * 0.05,
    }


if __name__ == "__main__":
    key = jax.random.PRNGKey(0)
    kp, kx = jax.random.split(key)
    params = init_params(kp)
    prep = prepare_params(params)     # one-time weight prep, off the forward path

    x = jax.random.randint(kx, (B, T), 0, VOCAB, dtype=jnp.int32)
    # max(lengths) = 6 < T = 8 to exercise the pad_packed truncation quirk.
    lengths = jnp.array([6, 4, 6, 3, 5, 6, 2, 6], dtype=jnp.int32)

    actor, critic = lstm_actor_critic(x, lengths, prep)
    actor = jax.block_until_ready(actor)
    critic = jax.block_until_ready(critic)

    a_ref, c_ref = reference(x, lengths, params)
    assert actor.shape == (B, VOCAB) and critic.shape == (B, 1)
    assert bool(jnp.all(jnp.isfinite(actor))) and bool(jnp.all(jnp.isfinite(critic)))
    assert bool(jnp.allclose(actor, a_ref, atol=1e-2, rtol=1e-2))
    assert bool(jnp.allclose(critic, c_ref, atol=1e-2, rtol=1e-2))

    print("KERNEL_OK")
</pallas_src>

<mosaic_0001>
module attributes {stable_mosaic.version = 11 : i64} {
  func.func @lstm_actor_critic_kernel(%arg0: memref<1xi32, #tpu.memory_space<smem>>, %arg1: memref<64x1xi32, #tpu.memory_space<vmem>>, %arg2: memref<8x1xf32, #tpu.memory_space<vmem>>, %arg3: memref<256x512xbf16, #tpu.memory_space<vmem>>, %arg4: memref<128x512xbf16, #tpu.memory_space<vmem>>, %arg5: memref<1x512xf32, #tpu.memory_space<vmem>>, %arg6: memref<128x384xbf16, #tpu.memory_space<vmem>>, %arg7: memref<1x384xf32, #tpu.memory_space<vmem>>, %arg8: memref<8x256xf32, #tpu.memory_space<vmem>>, %arg9: memref<8x1xf32, #tpu.memory_space<vmem>>, %arg10: memref<64x512xf32, #tpu.memory_space<vmem>>) attributes {dimension_semantics = [], scalar_prefetch = 0 : i64, scratch_operands = 1 : i64, tpu.core_type = #tpu.core_type<tc>} {
    %c0 = arith.constant 0 : index
    %0 = memref.load %arg0[%c0] : memref<1xi32, #tpu.memory_space<smem>>
    %1 = tpu.iota {dimensions = array<i32: 1>} : vector<64x256xi32>
    %c0_0 = arith.constant 0 : index
    %c0_1 = arith.constant 0 : index
    %2 = vector.load %arg1[%c0_0, %c0_1] : memref<64x1xi32, #tpu.memory_space<vmem>>, vector<64x1xi32>
    %3 = vector.broadcast %2 : vector<64x1xi32> to vector<64x256xi32>
    %4 = arith.cmpi eq, %1, %3 : vector<64x256xi32>
    %5 = arith.extui %4 : vector<64x256xi1> to vector<64x256xi32>
    %6 = arith.sitofp %5 : vector<64x256xi32> to vector<64x256xf32>
    %7 = arith.truncf %6 : vector<64x256xf32> to vector<64x256xbf16>
    %c0_2 = arith.constant 0 : index
    %c0_3 = arith.constant 0 : index
    %8 = vector.load %arg3[%c0_2, %c0_3] : memref<256x512xbf16, #tpu.memory_space<vmem>>, vector<256x512xbf16>
    %cst = arith.constant dense<0.000000e+00> : vector<64x512xf32>
    %9 = tpu.matmul %7, %8, %cst {dimension_numbers = #tpu.dot_dimension_numbers<[1], [0], [0], [1], [0, 0, 1, 1], [], []>} : vector<64x256xbf16>, vector<256x512xbf16>, vector<64x512xf32> -> vector<64x512xf32>
    %c0_4 = arith.constant 0 : index
    %c0_5 = arith.constant 0 : index
    %10 = vector.load %arg5[%c0_4, %c0_5] : memref<1x512xf32, #tpu.memory_space<vmem>>, vector<1x512xf32>
    %11 = vector.broadcast %10 : vector<1x512xf32> to vector<64x512xf32>
    %12 = arith.addf %9, %11 : vector<64x512xf32>
    %c0_6 = arith.constant 0 : index
    %c0_7 = arith.constant 0 : index
    %13 = vector.load %arg10[%c0_6, %c0_7] : memref<64x512xf32, #tpu.memory_space<vmem>>, vector<64x512xf32>
    tpu.vector_store %arg10[%c0_6, %c0_7], %12 {strides = array<i32>} : memref<64x512xf32, #tpu.memory_space<vmem>>, vector<64x512xf32>,
    %c0_8 = arith.constant 0 : index
    %c0_9 = arith.constant 0 : index
    %14 = vector.load %arg4[%c0_8, %c0_9] : memref<128x512xbf16, #tpu.memory_space<vmem>>, vector<128x512xbf16>
    %cst_10 = arith.constant 0.000000e+00 : f32
    %15 = vector.broadcast %cst_10 : f32 to vector<8x128xf32>
    %cst_11 = arith.constant 0.000000e+00 : f32
    %16 = vector.broadcast %cst_11 : f32 to vector<8x128xf32>
    %c0_12 = arith.constant 0 : index
    %c0_13 = arith.constant 0 : index
    %17 = vector.load %arg10[%c0_12, %c0_13] : memref<64x512xf32, #tpu.memory_space<vmem>>, vector<8x512xf32>
    %18 = arith.truncf %15 : vector<8x128xf32> to vector<8x128xbf16>
    %cst_14 = arith.constant dense<0.000000e+00> : vector<8x512xf32>
    %19 = tpu.matmul %18, %14, %cst_14 {dimension_numbers = #tpu.dot_dimension_numbers<[1], [0], [0], [1], [0, 0, 1, 1], [], []>} : vector<8x128xbf16>, vector<128x512xbf16>, vector<8x512xf32> -> vector<8x512xf32>
    %20 = arith.addf %17, %19 : vector<8x512xf32>
    %21 = vector.extract_strided_slice %20 {offsets = [0, 0], sizes = [8, 128], strides = [1, 1]} : vector<8x512xf32> to vector<8x128xf32>
    %cst_15 = arith.constant 5.000000e-01 : f32
    %22 = vector.broadcast %cst_15 : f32 to vector<8x128xf32>
    %23 = arith.mulf %22, %21 : vector<8x128xf32>
    %24 = math.tanh %23 : vector<8x128xf32>
    %cst_16 = arith.constant 5.000000e-01 : f32
    %25 = vector.broadcast %cst_16 : f32 to vector<8x128xf32>
    %26 = arith.mulf %25, %24 : vector<8x128xf32>
    %cst_17 = arith.constant 5.000000e-01 : f32
    %27 = vector.broadcast %cst_17 : f32 to vector<8x128xf32>
    %28 = arith.addf %26, %27 : vector<8x128xf32>
    %29 = vector.extract_strided_slice %20 {offsets = [0, 128], sizes = [8, 128], strides = [1, 1]} : vector<8x512xf32> to vector<8x128xf32>
    %cst_18 = arith.constant 5.000000e-01 : f32
    %30 = vector.broadcast %cst_18 : f32 to vector<8x128xf32>
    %31 = arith.mulf %30, %29 : vector<8x128xf32>
    %32 = math.tanh %31 : vector<8x128xf32>
    %cst_19 = arith.constant 5.000000e-01 : f32
    %33 = vector.broadcast %cst_19 : f32 to vector<8x128xf32>
    %34 = arith.mulf %33, %32 : vector<8x128xf32>
    %cst_20 = arith.constant 5.000000e-01 : f32
    %35 = vector.broadcast %cst_20 : f32 to vector<8x128xf32>
    %36 = arith.addf %34, %35 : vector<8x128xf32>
    %37 = vector.extract_strided_slice %20 {offsets = [0, 256], sizes = [8, 128], strides = [1, 1]} : vector<8x512xf32> to vector<8x128xf32>
    %38 = math.tanh %37 : vector<8x128xf32>
    %39 = vector.extract_strided_slice %20 {offsets = [0, 384], sizes = [8, 128], strides = [1, 1]} : vector<8x512xf32> to vector<8x128xf32>
    %cst_21 = arith.constant 5.000000e-01 : f32
    %40 = vector.broadcast %cst_21 : f32 to vector<8x128xf32>
    %41 = arith.mulf %40, %39 : vector<8x128xf32>
    %42 = math.tanh %41 : vector<8x128xf32>
    %cst_22 = arith.constant 5.000000e-01 : f32
    %43 = vector.broadcast %cst_22 : f32 to vector<8x128xf32>
    %44 = arith.mulf %43, %42 : vector<8x128xf32>
    %cst_23 = arith.constant 5.000000e-01 : f32
    %45 = vector.broadcast %cst_23 : f32 to vector<8x128xf32>
    %46 = arith.addf %44, %45 : vector<8x128xf32>
    %47 = arith.mulf %36, %16 : vector<8x128xf32>
    %48 = arith.mulf %28, %38 : vector<8x128xf32>
    %49 = arith.addf %47, %48 : vector<8x128xf32>
    %50 = math.tanh %49 : vector<8x128xf32>
    %51 = arith.mulf %46, %50 : vector<8x128xf32>
    %c0_i32 = arith.constant 0 : i32
    %52 = arith.cmpi sgt, %0, %c0_i32 : i32
    %53 = arith.select %52, %51, %15 : vector<8x128xf32>
    %54 = arith.select %52, %49, %16 : vector<8x128xf32>
    %c8 = arith.constant 8 : index
    %c0_24 = arith.constant 0 : index
    %55 = vector.load %arg10[%c8, %c0_24] : memref<64x512xf32, #tpu.memory_space<vmem>>, vector<8x512xf32>
    %56 = arith.truncf %53 : vector<8x128xf32> to vector<8x128xbf16>
    %cst_25 = arith.constant dense<0.000000e+00> : vector<8x512xf32>
    %57 = tpu.matmul %56, %14, %cst_25 {dimension_numbers = #tpu.dot_dimension_numbers<[1], [0], [0], [1], [0, 0, 1, 1], [], []>} : vector<8x128xbf16>, vector<128x512xbf16>, vector<8x512xf32> -> vector<8x512xf32>
    %58 = arith.addf %55, %57 : vector<8x512xf32>
    %59 = vector.extract_strided_slice %58 {offsets = [0, 0], sizes = [8, 128], strides = [1, 1]} : vector<8x512xf32> to vector<8x128xf32>
    %cst_26 = arith.constant 5.000000e-01 : f32
    %60 = vector.broadcast %cst_26 : f32 to vector<8x128xf32>
    %61 = arith.mulf %60, %59 : vector<8x128xf32>
    %62 = math.tanh %61 : vector<8x128xf32>
    %cst_27 = arith.constant 5.000000e-01 : f32
    %63 = vector.broadcast %cst_27 : f32 to vector<8x128xf32>
    %64 = arith.mulf %63, %62 : vector<8x128xf32>
    %cst_28 = arith.constant 5.000000e-01 : f32
    %65 = vector.broadcast %cst_28 : f32 to vector<8x128xf32>
    %66 = arith.addf %64, %65 : vector<8x128xf32>
    %67 = vector.extract_strided_slice %58 {offsets = [0, 128], sizes = [8, 128], strides = [1, 1]} : vector<8x512xf32> to vector<8x128xf32>
    %cst_29 = arith.constant 5.000000e-01 : f32
    %68 = vector.broadcast %cst_29 : f32 to vector<8x128xf32>
    %69 = arith.mulf %68, %67 : vector<8x128xf32>
    %70 = math.tanh %69 : vector<8x128xf32>
    %cst_30 = arith.constant 5.000000e-01 : f32
    %71 = vector.broadcast %cst_30 : f32 to vector<8x128xf32>
    %72 = arith.mulf %71, %70 : vector<8x128xf32>
    %cst_31 = arith.constant 5.000000e-01 : f32
    %73 = vector.broadcast %cst_31 : f32 to vector<8x128xf32>
    %74 = arith.addf %72, %73 : vector<8x128xf32>
    %75 = vector.extract_strided_slice %58 {offsets = [0, 256], sizes = [8, 128], strides = [1, 1]} : vector<8x512xf32> to vector<8x128xf32>
    %76 = math.tanh %75 : vector<8x128xf32>
    %77 = vector.extract_strided_slice %58 {offsets = [0, 384], sizes = [8, 128], strides = [1, 1]} : vector<8x512xf32> to vector<8x128xf32>
    %cst_32 = arith.constant 5.000000e-01 : f32
    %78 = vector.broadcast %cst_32 : f32 to vector<8x128xf32>
    %79 = arith.mulf %78, %77 : vector<8x128xf32>
    %80 = math.tanh %79 : vector<8x128xf32>
    %cst_33 = arith.constant 5.000000e-01 : f32
    %81 = vector.broadcast %cst_33 : f32 to vector<8x128xf32>
    %82 = arith.mulf %81, %80 : vector<8x128xf32>
    %cst_34 = arith.constant 5.000000e-01 : f32
    %83 = vector.broadcast %cst_34 : f32 to vector<8x128xf32>
    %84 = arith.addf %82, %83 : vector<8x128xf32>
    %85 = arith.mulf %74, %54 : vector<8x128xf32>
    %86 = arith.mulf %66, %76 : vector<8x128xf32>
    %87 = arith.addf %85, %86 : vector<8x128xf32>
    %88 = math.tanh %87 : vector<8x128xf32>
    %89 = arith.mulf %84, %88 : vector<8x128xf32>
    %c1_i32 = arith.constant 1 : i32
    %90 = arith.cmpi sgt, %0, %c1_i32 : i32
    %91 = arith.select %90, %89, %53 : vector<8x128xf32>
    %92 = arith.select %90, %87, %54 : vector<8x128xf32>
    %c16 = arith.constant 16 : index
    %c0_35 = arith.constant 0 : index
    %93 = vector.load %arg10[%c16, %c0_35] : memref<64x512xf32, #tpu.memory_space<vmem>>, vector<8x512xf32>
    %94 = arith.truncf %91 : vector<8x128xf32> to vector<8x128xbf16>
    %cst_36 = arith.constant dense<0.000000e+00> : vector<8x512xf32>
    %95 = tpu.matmul %94, %14, %cst_36 {dimension_numbers = #tpu.dot_dimension_numbers<[1], [0], [0], [1], [0, 0, 1, 1], [], []>} : vector<8x128xbf16>, vector<128x512xbf16>, vector<8x512xf32> -> vector<8x512xf32>
    %96 = arith.addf %93, %95 : vector<8x512xf32>
    %97 = vector.extract_strided_slice %96 {offsets = [0, 0], sizes = [8, 128], strides = [1, 1]} : vector<8x512xf32> to vector<8x128xf32>
    %cst_37 = arith.constant 5.000000e-01 : f32
    %98 = vector.broadcast %cst_37 : f32 to vector<8x128xf32>
    %99 = arith.mulf %98, %97 : vector<8x128xf32>
    %100 = math.tanh %99 : vector<8x128xf32>
    %cst_38 = arith.constant 5.000000e-01 : f32
    %101 = vector.broadcast %cst_38 : f32 to vector<8x128xf32>
    %102 = arith.mulf %101, %100 : vector<8x128xf32>
    %cst_39 = arith.constant 5.000000e-01 : f32
    %103 = vector.broadcast %cst_39 : f32 to vector<8x128xf32>
    %104 = arith.addf %102, %103 : vector<8x128xf32>
    %105 = vector.extract_strided_slice %96 {offsets = [0, 128], sizes = [8, 128], strides = [1, 1]} : vector<8x512xf32> to vector<8x128xf32>
    %cst_40 = arith.constant 5.000000e-01 : f32
    %106 = vector.broadcast %cst_40 : f32 to vector<8x128xf32>
    %107 = arith.mulf %106, %105 : vector<8x128xf32>
    %108 = math.tanh %107 : vector<8x128xf32>
    %cst_41 = arith.constant 5.000000e-01 : f32
    %109 = vector.broadcast %cst_41 : f32 to vector<8x128xf32>
    %110 = arith.mulf %109, %108 : vector<8x128xf32>
    %cst_42 = arith.constant 5.000000e-01 : f32
    %111 = vector.broadcast %cst_42 : f32 to vector<8x128xf32>
    %112 = arith.addf %110, %111 : vector<8x128xf32>
    %113 = vector.extract_strided_slice %96 {offsets = [0, 256], sizes = [8, 128], strides = [1, 1]} : vector<8x512xf32> to vector<8x128xf32>
    %114 = math.tanh %113 : vector<8x128xf32>
    %115 = vector.extract_strided_slice %96 {offsets = [0, 384], sizes = [8, 128], strides = [1, 1]} : vector<8x512xf32> to vector<8x128xf32>
    %cst_43 = arith.constant 5.000000e-01 : f32
    %116 = vector.broadcast %cst_43 : f32 to vector<8x128xf32>
    %117 = arith.mulf %116, %115 : vector<8x128xf32>
    %118 = math.tanh %117 : vector<8x128xf32>
    %cst_44 = arith.constant 5.000000e-01 : f32
    %119 = vector.broadcast %cst_44 : f32 to vector<8x128xf32>
    %120 = arith.mulf %119, %118 : vector<8x128xf32>
    %cst_45 = arith.constant 5.000000e-01 : f32
    %121 = vector.broadcast %cst_45 : f32 to vector<8x128xf32>
    %122 = arith.addf %120, %121 : vector<8x128xf32>
    %123 = arith.mulf %112, %92 : vector<8x128xf32>
    %124 = arith.mulf %104, %114 : vector<8x128xf32>
    %125 = arith.addf %123, %124 : vector<8x128xf32>
    %126 = math.tanh %125 : vector<8x128xf32>
    %127 = arith.mulf %122, %126 : vector<8x128xf32>
    %c2_i32 = arith.constant 2 : i32
    %128 = arith.cmpi sgt, %0, %c2_i32 : i32
    %129 = arith.select %128, %127, %91 : vector<8x128xf32>
    %130 = arith.select %128, %125, %92 : vector<8x128xf32>
    %c24 = arith.constant 24 : index
    %c0_46 = arith.constant 0 : index
    %131 = vector.load %arg10[%c24, %c0_46] : memref<64x512xf32, #tpu.memory_space<vmem>>, vector<8x512xf32>
    %132 = arith.truncf %129 : vector<8x128xf32> to vector<8x128xbf16>
    %cst_47 = arith.constant dense<0.000000e+00> : vector<8x512xf32>
    %133 = tpu.matmul %132, %14, %cst_47 {dimension_numbers = #tpu.dot_dimension_numbers<[1], [0], [0], [1], [0, 0, 1, 1], [], []>} : vector<8x128xbf16>, vector<128x512xbf16>, vector<8x512xf32> -> vector<8x512xf32>
    %134 = arith.addf %131, %133 : vector<8x512xf32>
    %135 = vector.extract_strided_slice %134 {offsets = [0, 0], sizes = [8, 128], strides = [1, 1]} : vector<8x512xf32> to vector<8x128xf32>
    %cst_48 = arith.constant 5.000000e-01 : f32
    %136 = vector.broadcast %cst_48 : f32 to vector<8x128xf32>
    %137 = arith.mulf %136, %135 : vector<8x128xf32>
    %138 = math.tanh %137 : vector<8x128xf32>
    %cst_49 = arith.constant 5.000000e-01 : f32
    %139 = vector.broadcast %cst_49 : f32 to vector<8x128xf32>
    %140 = arith.mulf %139, %138 : vector<8x128xf32>
    %cst_50 = arith.constant 5.000000e-01 : f32
    %141 = vector.broadcast %cst_50 : f32 to vector<8x128xf32>
    %142 = arith.addf %140, %141 : vector<8x128xf32>
    %143 = vector.extract_strided_slice %134 {offsets = [0, 128], sizes = [8, 128], strides = [1, 1]} : vector<8x512xf32> to vector<8x128xf32>
    %cst_51 = arith.constant 5.000000e-01 : f32
    %144 = vector.broadcast %cst_51 : f32 to vector<8x128xf32>
    %145 = arith.mulf %144, %143 : vector<8x128xf32>
    %146 = math.tanh %145 : vector<8x128xf32>
    %cst_52 = arith.constant 5.000000e-01 : f32
    %147 = vector.broadcast %cst_52 : f32 to vector<8x128xf32>
    %148 = arith.mulf %147, %146 : vector<8x128xf32>
    %cst_53 = arith.constant 5.000000e-01 : f32
    %149 = vector.broadcast %cst_53 : f32 to vector<8x128xf32>
    %150 = arith.addf %148, %149 : vector<8x128xf32>
    %151 = vector.extract_strided_slice %134 {offsets = [0, 256], sizes = [8, 128], strides = [1, 1]} : vector<8x512xf32> to vector<8x128xf32>
    %152 = math.tanh %151 : vector<8x128xf32>
    %153 = vector.extract_strided_slice %134 {offsets = [0, 384], sizes = [8, 128], strides = [1, 1]} : vector<8x512xf32> to vector<8x128xf32>
    %cst_54 = arith.constant 5.000000e-01 : f32
    %154 = vector.broadcast %cst_54 : f32 to vector<8x128xf32>
    %155 = arith.mulf %154, %153 : vector<8x128xf32>
    %156 = math.tanh %155 : vector<8x128xf32>
    %cst_55 = arith.constant 5.000000e-01 : f32
    %157 = vector.broadcast %cst_55 : f32 to vector<8x128xf32>
    %158 = arith.mulf %157, %156 : vector<8x128xf32>
    %cst_56 = arith.constant 5.000000e-01 : f32
    %159 = vector.broadcast %cst_56 : f32 to vector<8x128xf32>
    %160 = arith.addf %158, %159 : vector<8x128xf32>
    %161 = arith.mulf %150, %130 : vector<8x128xf32>
    %162 = arith.mulf %142, %152 : vector<8x128xf32>
    %163 = arith.addf %161, %162 : vector<8x128xf32>
    %164 = math.tanh %163 : vector<8x128xf32>
    %165 = arith.mulf %160, %164 : vector<8x128xf32>
    %c3_i32 = arith.constant 3 : i32
    %166 = arith.cmpi sgt, %0, %c3_i32 : i32
    %167 = arith.select %166, %165, %129 : vector<8x128xf32>
    %168 = arith.select %166, %163, %130 : vector<8x128xf32>
    %c32 = arith.constant 32 : index
    %c0_57 = arith.constant 0 : index
    %169 = vector.load %arg10[%c32, %c0_57] : memref<64x512xf32, #tpu.memory_space<vmem>>, vector<8x512xf32>
    %170 = arith.truncf %167 : vector<8x128xf32> to vector<8x128xbf16>
    %cst_58 = arith.constant dense<0.000000e+00> : vector<8x512xf32>
    %171 = tpu.matmul %170, %14, %cst_58 {dimension_numbers = #tpu.dot_dimension_numbers<[1], [0], [0], [1], [0, 0, 1, 1], [], []>} : vector<8x128xbf16>, vector<128x512xbf16>, vector<8x512xf32> -> vector<8x512xf32>
    %172 = arith.addf %169, %171 : vector<8x512xf32>
    %173 = vector.extract_strided_slice %172 {offsets = [0, 0], sizes = [8, 128], strides = [1, 1]} : vector<8x512xf32> to vector<8x128xf32>
    %cst_59 = arith.constant 5.000000e-01 : f32
    %174 = vector.broadcast %cst_59 : f32 to vector<8x128xf32>
    %175 = arith.mulf %174, %173 : vector<8x128xf32>
    %176 = math.tanh %175 : vector<8x128xf32>
    %cst_60 = arith.constant 5.000000e-01 : f32
    %177 = vector.broadcast %cst_60 : f32 to vector<8x128xf32>
    %178 = arith.mulf %177, %176 : vector<8x128xf32>
    %cst_61 = arith.constant 5.000000e-01 : f32
    %179 = vector.broadcast %cst_61 : f32 to vector<8x128xf32>
    %180 = arith.addf %178, %179 : vector<8x128xf32>
    %181 = vector.extract_strided_slice %172 {offsets = [0, 128], sizes = [8, 128], strides = [1, 1]} : vector<8x512xf32> to vector<8x128xf32>
    %cst_62 = arith.constant 5.000000e-01 : f32
    %182 = vector.broadcast %cst_62 : f32 to vector<8x128xf32>
    %183 = arith.mulf %182, %181 : vector<8x128xf32>
    %184 = math.tanh %183 : vector<8x128xf32>
    %cst_63 = arith.constant 5.000000e-01 : f32
    %185 = vector.broadcast %cst_63 : f32 to vector<8x128xf32>
    %186 = arith.mulf %185, %184 : vector<8x128xf32>
    %cst_64 = arith.constant 5.000000e-01 : f32
    %187 = vector.broadcast %cst_64 : f32 to vector<8x128xf32>
    %188 = arith.addf %186, %187 : vector<8x128xf32>
    %189 = vector.extract_strided_slice %172 {offsets = [0, 256], sizes = [8, 128], strides = [1, 1]} : vector<8x512xf32> to vector<8x128xf32>
    %190 = math.tanh %189 : vector<8x128xf32>
    %191 = vector.extract_strided_slice %172 {offsets = [0, 384], sizes = [8, 128], strides = [1, 1]} : vector<8x512xf32> to vector<8x128xf32>
    %cst_65 = arith.constant 5.000000e-01 : f32
    %192 = vector.broadcast %cst_65 : f32 to vector<8x128xf32>
    %193 = arith.mulf %192, %191 : vector<8x128xf32>
    %194 = math.tanh %193 : vector<8x128xf32>
    %cst_66 = arith.constant 5.000000e-01 : f32
    %195 = vector.broadcast %cst_66 : f32 to vector<8x128xf32>
    %196 = arith.mulf %195, %194 : vector<8x128xf32>
    %cst_67 = arith.constant 5.000000e-01 : f32
    %197 = vector.broadcast %cst_67 : f32 to vector<8x128xf32>
    %198 = arith.addf %196, %197 : vector<8x128xf32>
    %199 = arith.mulf %188, %168 : vector<8x128xf32>
    %200 = arith.mulf %180, %190 : vector<8x128xf32>
    %201 = arith.addf %199, %200 : vector<8x128xf32>
    %202 = math.tanh %201 : vector<8x128xf32>
    %203 = arith.mulf %198, %202 : vector<8x128xf32>
    %c4_i32 = arith.constant 4 : i32
    %204 = arith.cmpi sgt, %0, %c4_i32 : i32
    %205 = arith.select %204, %203, %167 : vector<8x128xf32>
    %206 = arith.select %204, %201, %168 : vector<8x128xf32>
    %c40 = arith.constant 40 : index
    %c0_68 = arith.constant 0 : index
    %207 = vector.load %arg10[%c40, %c0_68] : memref<64x512xf32, #tpu.memory_space<vmem>>, vector<8x512xf32>
    %208 = arith.truncf %205 : vector<8x128xf32> to vector<8x128xbf16>
    %cst_69 = arith.constant dense<0.000000e+00> : vector<8x512xf32>
    %209 = tpu.matmul %208, %14, %cst_69 {dimension_numbers = #tpu.dot_dimension_numbers<[1], [0], [0], [1], [0, 0, 1, 1], [], []>} : vector<8x128xbf16>, vector<128x512xbf16>, vector<8x512xf32> -> vector<8x512xf32>
    %210 = arith.addf %207, %209 : vector<8x512xf32>
    %211 = vector.extract_strided_slice %210 {offsets = [0, 0], sizes = [8, 128], strides = [1, 1]} : vector<8x512xf32> to vector<8x128xf32>
    %cst_70 = arith.constant 5.000000e-01 : f32
    %212 = vector.broadcast %cst_70 : f32 to vector<8x128xf32>
    %213 = arith.mulf %212, %211 : vector<8x128xf32>
    %214 = math.tanh %213 : vector<8x128xf32>
    %cst_71 = arith.constant 5.000000e-01 : f32
    %215 = vector.broadcast %cst_71 : f32 to vector<8x128xf32>
    %216 = arith.mulf %215, %214 : vector<8x128xf32>
    %cst_72 = arith.constant 5.000000e-01 : f32
    %217 = vector.broadcast %cst_72 : f32 to vector<8x128xf32>
    %218 = arith.addf %216, %217 : vector<8x128xf32>
    %219 = vector.extract_strided_slice %210 {offsets = [0, 128], sizes = [8, 128], strides = [1, 1]} : vector<8x512xf32> to vector<8x128xf32>
    %cst_73 = arith.constant 5.000000e-01 : f32
    %220 = vector.broadcast %cst_73 : f32 to vector<8x128xf32>
    %221 = arith.mulf %220, %219 : vector<8x128xf32>
    %222 = math.tanh %221 : vector<8x128xf32>
    %cst_74 = arith.constant 5.000000e-01 : f32
    %223 = vector.broadcast %cst_74 : f32 to vector<8x128xf32>
    %224 = arith.mulf %223, %222 : vector<8x128xf32>
    %cst_75 = arith.constant 5.000000e-01 : f32
    %225 = vector.broadcast %cst_75 : f32 to vector<8x128xf32>
    %226 = arith.addf %224, %225 : vector<8x128xf32>
    %227 = vector.extract_strided_slice %210 {offsets = [0, 256], sizes = [8, 128], strides = [1, 1]} : vector<8x512xf32> to vector<8x128xf32>
    %228 = math.tanh %227 : vector<8x128xf32>
    %229 = vector.extract_strided_slice %210 {offsets = [0, 384], sizes = [8, 128], strides = [1, 1]} : vector<8x512xf32> to vector<8x128xf32>
    %cst_76 = arith.constant 5.000000e-01 : f32
    %230 = vector.broadcast %cst_76 : f32 to vector<8x128xf32>
    %231 = arith.mulf %230, %229 : vector<8x128xf32>
    %232 = math.tanh %231 : vector<8x128xf32>
    %cst_77 = arith.constant 5.000000e-01 : f32
    %233 = vector.broadcast %cst_77 : f32 to vector<8x128xf32>
    %234 = arith.mulf %233, %232 : vector<8x128xf32>
    %cst_78 = arith.constant 5.000000e-01 : f32
    %235 = vector.broadcast %cst_78 : f32 to vector<8x128xf32>
    %236 = arith.addf %234, %235 : vector<8x128xf32>
    %237 = arith.mulf %226, %206 : vector<8x128xf32>
    %238 = arith.mulf %218, %228 : vector<8x128xf32>
    %239 = arith.addf %237, %238 : vector<8x128xf32>
    %240 = math.tanh %239 : vector<8x128xf32>
    %241 = arith.mulf %236, %240 : vector<8x128xf32>
    %c5_i32 = arith.constant 5 : i32
    %242 = arith.cmpi sgt, %0, %c5_i32 : i32
    %243 = arith.select %242, %241, %205 : vector<8x128xf32>
    %244 = arith.select %242, %239, %206 : vector<8x128xf32>
    %c48 = arith.constant 48 : index
    %c0_79 = arith.constant 0 : index
    %245 = vector.load %arg10[%c48, %c0_79] : memref<64x512xf32, #tpu.memory_space<vmem>>, vector<8x512xf32>
    %246 = arith.truncf %243 : vector<8x128xf32> to vector<8x128xbf16>
    %cst_80 = arith.constant dense<0.000000e+00> : vector<8x512xf32>
    %247 = tpu.matmul %246, %14, %cst_80 {dimension_numbers = #tpu.dot_dimension_numbers<[1], [0], [0], [1], [0, 0, 1, 1], [], []>} : vector<8x128xbf16>, vector<128x512xbf16>, vector<8x512xf32> -> vector<8x512xf32>
    %248 = arith.addf %245, %247 : vector<8x512xf32>
    %249 = vector.extract_strided_slice %248 {offsets = [0, 0], sizes = [8, 128], strides = [1, 1]} : vector<8x512xf32> to vector<8x128xf32>
    %cst_81 = arith.constant 5.000000e-01 : f32
    %250 = vector.broadcast %cst_81 : f32 to vector<8x128xf32>
    %251 = arith.mulf %250, %249 : vector<8x128xf32>
    %252 = math.tanh %251 : vector<8x128xf32>
    %cst_82 = arith.constant 5.000000e-01 : f32
    %253 = vector.broadcast %cst_82 : f32 to vector<8x128xf32>
    %254 = arith.mulf %253, %252 : vector<8x128xf32>
    %cst_83 = arith.constant 5.000000e-01 : f32
    %255 = vector.broadcast %cst_83 : f32 to vector<8x128xf32>
    %256 = arith.addf %254, %255 : vector<8x128xf32>
    %257 = vector.extract_strided_slice %248 {offsets = [0, 128], sizes = [8, 128], strides = [1, 1]} : vector<8x512xf32> to vector<8x128xf32>
    %cst_84 = arith.constant 5.000000e-01 : f32
    %258 = vector.broadcast %cst_84 : f32 to vector<8x128xf32>
    %259 = arith.mulf %258, %257 : vector<8x128xf32>
    %260 = math.tanh %259 : vector<8x128xf32>
    %cst_85 = arith.constant 5.000000e-01 : f32
    %261 = vector.broadcast %cst_85 : f32 to vector<8x128xf32>
    %262 = arith.mulf %261, %260 : vector<8x128xf32>
    %cst_86 = arith.constant 5.000000e-01 : f32
    %263 = vector.broadcast %cst_86 : f32 to vector<8x128xf32>
    %264 = arith.addf %262, %263 : vector<8x128xf32>
    %265 = vector.extract_strided_slice %248 {offsets = [0, 256], sizes = [8, 128], strides = [1, 1]} : vector<8x512xf32> to vector<8x128xf32>
    %266 = math.tanh %265 : vector<8x128xf32>
    %267 = vector.extract_strided_slice %248 {offsets = [0, 384], sizes = [8, 128], strides = [1, 1]} : vector<8x512xf32> to vector<8x128xf32>
    %cst_87 = arith.constant 5.000000e-01 : f32
    %268 = vector.broadcast %cst_87 : f32 to vector<8x128xf32>
    %269 = arith.mulf %268, %267 : vector<8x128xf32>
    %270 = math.tanh %269 : vector<8x128xf32>
    %cst_88 = arith.constant 5.000000e-01 : f32
    %271 = vector.broadcast %cst_88 : f32 to vector<8x128xf32>
    %272 = arith.mulf %271, %270 : vector<8x128xf32>
    %cst_89 = arith.constant 5.000000e-01 : f32
    %273 = vector.broadcast %cst_89 : f32 to vector<8x128xf32>
    %274 = arith.addf %272, %273 : vector<8x128xf32>
    %275 = arith.mulf %264, %244 : vector<8x128xf32>
    %276 = arith.mulf %256, %266 : vector<8x128xf32>
    %277 = arith.addf %275, %276 : vector<8x128xf32>
    %278 = math.tanh %277 : vector<8x128xf32>
    %279 = arith.mulf %274, %278 : vector<8x128xf32>
    %c6_i32 = arith.constant 6 : i32
    %280 = arith.cmpi sgt, %0, %c6_i32 : i32
    %281 = arith.select %280, %279, %243 : vector<8x128xf32>
    %282 = arith.select %280, %277, %244 : vector<8x128xf32>
    %c56 = arith.constant 56 : index
    %c0_90 = arith.constant 0 : index
    %283 = vector.load %arg10[%c56, %c0_90] : memref<64x512xf32, #tpu.memory_space<vmem>>, vector<8x512xf32>
    %284 = arith.truncf %281 : vector<8x128xf32> to vector<8x128xbf16>
    %cst_91 = arith.constant dense<0.000000e+00> : vector<8x512xf32>
    %285 = tpu.matmul %284, %14, %cst_91 {dimension_numbers = #tpu.dot_dimension_numbers<[1], [0], [0], [1], [0, 0, 1, 1], [], []>} : vector<8x128xbf16>, vector<128x512xbf16>, vector<8x512xf32> -> vector<8x512xf32>
    %286 = arith.addf %283, %285 : vector<8x512xf32>
    %287 = vector.extract_strided_slice %286 {offsets = [0, 0], sizes = [8, 128], strides = [1, 1]} : vector<8x512xf32> to vector<8x128xf32>
    %cst_92 = arith.constant 5.000000e-01 : f32
    %288 = vector.broadcast %cst_92 : f32 to vector<8x128xf32>
    %289 = arith.mulf %288, %287 : vector<8x128xf32>
    %290 = math.tanh %289 : vector<8x128xf32>
    %cst_93 = arith.constant 5.000000e-01 : f32
    %291 = vector.broadcast %cst_93 : f32 to vector<8x128xf32>
    %292 = arith.mulf %291, %290 : vector<8x128xf32>
    %cst_94 = arith.constant 5.000000e-01 : f32
    %293 = vector.broadcast %cst_94 : f32 to vector<8x128xf32>
    %294 = arith.addf %292, %293 : vector<8x128xf32>
    %295 = vector.extract_strided_slice %286 {offsets = [0, 128], sizes = [8, 128], strides = [1, 1]} : vector<8x512xf32> to vector<8x128xf32>
    %cst_95 = arith.constant 5.000000e-01 : f32
    %296 = vector.broadcast %cst_95 : f32 to vector<8x128xf32>
    %297 = arith.mulf %296, %295 : vector<8x128xf32>
    %298 = math.tanh %297 : vector<8x128xf32>
    %cst_96 = arith.constant 5.000000e-01 : f32
    %299 = vector.broadcast %cst_96 : f32 to vector<8x128xf32>
    %300 = arith.mulf %299, %298 : vector<8x128xf32>
    %cst_97 = arith.constant 5.000000e-01 : f32
    %301 = vector.broadcast %cst_97 : f32 to vector<8x128xf32>
    %302 = arith.addf %300, %301 : vector<8x128xf32>
    %303 = vector.extract_strided_slice %286 {offsets = [0, 256], sizes = [8, 128], strides = [1, 1]} : vector<8x512xf32> to vector<8x128xf32>
    %304 = math.tanh %303 : vector<8x128xf32>
    %305 = vector.extract_strided_slice %286 {offsets = [0, 384], sizes = [8, 128], strides = [1, 1]} : vector<8x512xf32> to vector<8x128xf32>
    %cst_98 = arith.constant 5.000000e-01 : f32
    %306 = vector.broadcast %cst_98 : f32 to vector<8x128xf32>
    %307 = arith.mulf %306, %305 : vector<8x128xf32>
    %308 = math.tanh %307 : vector<8x128xf32>
    %cst_99 = arith.constant 5.000000e-01 : f32
    %309 = vector.broadcast %cst_99 : f32 to vector<8x128xf32>
    %310 = arith.mulf %309, %308 : vector<8x128xf32>
    %cst_100 = arith.constant 5.000000e-01 : f32
    %311 = vector.broadcast %cst_100 : f32 to vector<8x128xf32>
    %312 = arith.addf %310, %311 : vector<8x128xf32>
    %313 = arith.mulf %302, %282 : vector<8x128xf32>
    %314 = arith.mulf %294, %304 : vector<8x128xf32>
    %315 = arith.addf %313, %314 : vector<8x128xf32>
    %316 = math.tanh %315 : vector<8x128xf32>
    %317 = arith.mulf %312, %316 : vector<8x128xf32>
    %c7_i32 = arith.constant 7 : i32
    %318 = arith.cmpi sgt, %0, %c7_i32 : i32
    %319 = arith.select %318, %317, %281 : vector<8x128xf32>
    %c0_101 = arith.constant 0 : index
    %c0_102 = arith.constant 0 : index
    %320 = vector.load %arg2[%c0_101, %c0_102] : memref<8x1xf32, #tpu.memory_space<vmem>>, vector<8x1xf32>
    %321 = vector.broadcast %320 : vector<8x1xf32> to vector<8x128xf32>
    %322 = arith.mulf %319, %321 : vector<8x128xf32>
    %323 = arith.truncf %322 : vector<8x128xf32> to vector<8x128xbf16>
    %c0_103 = arith.constant 0 : index
    %c0_104 = arith.constant 0 : index
    %324 = vector.load %arg6[%c0_103, %c0_104] : memref<128x384xbf16, #tpu.memory_space<vmem>>, vector<128x384xbf16>
    %cst_105 = arith.constant dense<0.000000e+00> : vector<8x384xf32>
    %325 = tpu.matmul %323, %324, %cst_105 {dimension_numbers = #tpu.dot_dimension_numbers<[1], [0], [0], [1], [0, 0, 1, 1], [], []>} : vector<8x128xbf16>, vector<128x384xbf16>, vector<8x384xf32> -> vector<8x384xf32>
    %c0_106 = arith.constant 0 : index
    %c0_107 = arith.constant 0 : index
    %326 = vector.load %arg7[%c0_106, %c0_107] : memref<1x384xf32, #tpu.memory_space<vmem>>, vector<1x384xf32>
    %327 = vector.broadcast %326 : vector<1x384xf32> to vector<8x384xf32>
    %328 = arith.addf %325, %327 : vector<8x384xf32>
    %329 = vector.extract_strided_slice %328 {offsets = [0, 0], sizes = [8, 256], strides = [1, 1]} : vector<8x384xf32> to vector<8x256xf32>
    %cst_108 = arith.constant dense<0xFF800000> : vector<8xf32>
    %330 = vector.multi_reduction <maximumf>, %329, %cst_108 [1] : vector<8x256xf32> to vector<8xf32>
    %331 = vector.shape_cast %330 : vector<8xf32> to vector<8x1xf32>
    %332 = vector.broadcast %331 : vector<8x1xf32> to vector<8x256xf32>
    %333 = arith.subf %329, %332 : vector<8x256xf32>
    %334 = math.exp %333 : vector<8x256xf32>
    %cst_109 = arith.constant dense<0.000000e+00> : vector<8xf32>
    %335 = vector.multi_reduction <add>, %334, %cst_109 [1] : vector<8x256xf32> to vector<8xf32>
    %336 = vector.shape_cast %335 : vector<8xf32> to vector<8x1xf32>
    %337 = tpu.reciprocal %336 {approx = true} : vector<8x1xf32> -> vector<8x1xf32>
    %338 = vector.broadcast %337 : vector<8x1xf32> to vector<8x256xf32>
    %339 = arith.mulf %334, %338 : vector<8x256xf32>
    %c0_110 = arith.constant 0 : index
    %c0_111 = arith.constant 0 : index
    %340 = vector.load %arg8[%c0_110, %c0_111] : memref<8x256xf32, #tpu.memory_space<vmem>>, vector<8x256xf32>
    tpu.vector_store %arg8[%c0_110, %c0_111], %339 {strides = array<i32>} : memref<8x256xf32, #tpu.memory_space<vmem>>, vector<8x256xf32>,
    %341 = vector.extract_strided_slice %328 {offsets = [0, 256], sizes = [8, 1], strides = [1, 1]} : vector<8x384xf32> to vector<8x1xf32>
    %c0_112 = arith.constant 0 : index
    %c0_113 = arith.constant 0 : index
    %342 = vector.load %arg9[%c0_112, %c0_113] : memref<8x1xf32, #tpu.memory_space<vmem>>, vector<8x1xf32>
    tpu.vector_store %arg9[%c0_112, %c0_113], %341 {strides = array<i32>} : memref<8x1xf32, #tpu.memory_space<vmem>>, vector<8x1xf32>,
    return
  }
}

</mosaic_0001>

<llo_original>
// kernel: lstm_actor_critic.1
$region0: #{lstm_actor_critic.1}
  #allocation0 [shape = 'u32[]', space=smem, size = 0x4, offset = 0x4, fixed_abs, tag = 'smem constant byte address 0x4 - core index']
  #allocation1 [shape = 'u32[144,128]{1,0:T(1,128)}', space=vmem, size = 0x12000, scoped, tag = 'internal scratch']
  #allocation2 [shape = 'f32[64,512]{1,0:T(8,128)}', space=vmem, size = 0x20000, scoped, tag = 'scratch operand']
  #allocation3 [shape = 's32[1]{0:T(128)S(6)}', space=smem, size = 0x200, scoped, tag = 'scoped memory for lstm_actor_critic.1']
  %s0 = inlined_call_operand.<no memory space> [shape: s32[1], index: 0, kind: input, shape index: {}]
  %s1 = inlined_call_operand.vmem [shape: s32[64,1], index: 1, kind: input, shape index: {}]
  %s2 = inlined_call_operand.vmem [shape: f32[8,1], index: 2, kind: input, shape index: {}]
  %s3 = inlined_call_operand.hbm [shape: bf16[256,512], index: 3, kind: input, shape index: {}]
  %s4 = inlined_call_operand.hbm [shape: bf16[128,512], index: 4, kind: input, shape index: {}]
  %s5 = inlined_call_operand.vmem [shape: f32[1,512], index: 5, kind: input, shape index: {}]
  %s6 = inlined_call_operand.hbm [shape: bf16[128,384], index: 6, kind: input, shape index: {}]
  %s7 = inlined_call_operand.vmem [shape: f32[1,384], index: 7, kind: input, shape index: {}]
  %s8 = inlined_call_operand.hbm [shape: f32[8,256], index: 8, kind: output, shape index: {0}]
  %s9 = inlined_call_operand.vmem [shape: f32[8,1], index: 9, kind: output, shape index: {1}]
  %10 = xla_tuple %s8, %s9
  %s11 = sld [smem:[#allocation0]]
  $region62: #{lstm_actor_critic.1} parent=0
    _
  %s13 = ssub.s32 1, %s11
  %s14 = scalar_select 0, %s13, %s11
  %15 = sst [smem:[#allocation3]] %s0
  $region1: #{lstm_actor_critic.1} parent=0
    #allocation4 [shape = 'u8[262144]{0}', space=vmem, size = 0x40000, scoped, tag = 'input window, operand 3, single buffered']
    #allocation5 [shape = 's32[1]{0}', space=sflag, size = 0x4, scoped, tag = 'scoped memory for lstm_actor_critic.1']
    #allocation6 [shape = 's32[1]{0}', space=sflag, size = 0x4, scoped, tag = 'scoped memory for lstm_actor_critic.1']
    #allocation7 [shape = 'u8[131072]{0}', space=vmem, size = 0x20000, scoped, tag = 'input window, operand 4, single buffered']
    #allocation8 [shape = 's32[1]{0}', space=sflag, size = 0x4, scoped, tag = 'scoped memory for lstm_actor_critic.1']
    #allocation9 [shape = 'u8[98304]{0}', space=vmem, size = 0x18000, scoped, tag = 'input window, operand 6, single buffered']
    #allocation10 [shape = 'u8[8192]{0}', space=vmem, size = 0x2000, scoped, tag = 'output window, operand 0, single buffered']
    %16 = vsyncpa [#allocation5], 0
    %17 = vsyncpa [#allocation8], 0
    %18 = vsyncpa [#allocation6], 0
    // Predicated region
    $region2: #{lstm_actor_critic.1} parent=1 // pred_check
      _
    $region3: #{lstm_actor_critic.1} parent=1 // pred_check_branch
      %20 = sbr.rel (0) target = $region5
    $region4: #{lstm_actor_critic.1} parent=1 // pred_region
      _
    $region5: #{lstm_actor_critic.1} parent=1 // pred_fallthru
      _
    // Predicated region
    $region6: #{lstm_actor_critic.1} parent=1 // pred_check
      _
    $region7: #{lstm_actor_critic.1} parent=1 // pred_check_branch
      %22 = sbr.rel (0) target = $region9
    $region8: #{lstm_actor_critic.1} parent=1 // pred_region
      _
    $region9: #{lstm_actor_critic.1} parent=1 // pred_fallthru
      _
    // Predicated region
    $region10: #{lstm_actor_critic.1} parent=1 // pred_check
      _
    $region11: #{lstm_actor_critic.1} parent=1 // pred_check_branch
      %24 = sbr.rel (0) target = $region13
    $region12: #{lstm_actor_critic.1} parent=1 // pred_region
      _
    $region13: #{lstm_actor_critic.1} parent=1 // pred_fallthru
      _
    // Predicated region
    $region14: #{lstm_actor_critic.1} parent=1 // pred_check
      _
    $region15: #{lstm_actor_critic.1} parent=1 // pred_check_branch
      %26 = sbr.rel (0) target = $region17
    $region16: #{lstm_actor_critic.1} parent=1 // pred_region
      %s28 = ssub.s32 8192, 8192
      %29 = vsyncadd [#allocation5], %s28
      %s30 = sshll.u32 [#allocation4], 4
      %s31 = int_to_ptr.vmem [resolvable:$true] %s30
      %36 = dma.hbm_to_vmem [thread:$0]  %s3, 8192, %s31, [#allocation5], 256, 256, 16
    $region17: #{lstm_actor_critic.1} parent=1 // pred_fallthru
      _
    // Predicated region
    $region18: #{lstm_actor_critic.1} parent=1 // pred_check
      _
    $region19: #{lstm_actor_critic.1} parent=1 // pred_check_branch
      %38 = sbr.rel (0) target = $region21
    $region20: #{lstm_actor_critic.1} parent=1 // pred_region
      %s40 = ssub.s32 4096, 4096
      %41 = vsyncadd [#allocation8], %s40
      %s42 = sshll.u32 [#allocation7], 4
      %s43 = int_to_ptr.vmem [resolvable:$true] %s42
      %48 = dma.hbm_to_vmem [thread:$0]  %s4, 4096, %s43, [#allocation8], 256, 256, 16
    $region21: #{lstm_actor_critic.1} parent=1 // pred_fallthru
      _
    // Predicated region
    $region22: #{lstm_actor_critic.1} parent=1 // pred_check
      _
    $region23: #{lstm_actor_critic.1} parent=1 // pred_check_branch
      %50 = sbr.rel (0) target = $region25
    $region24: #{lstm_actor_critic.1} parent=1 // pred_region
      _
    $region25: #{lstm_actor_critic.1} parent=1 // pred_fallthru
      _
    // Predicated region
    $region26: #{lstm_actor_critic.1} parent=1 // pred_check
      _
    $region27: #{lstm_actor_critic.1} parent=1 // pred_check_branch
      %52 = sbr.rel (0) target = $region29
    $region28: #{lstm_actor_critic.1} parent=1 // pred_region
      %s54 = ssub.s32 3072, 3072
      %55 = vsyncadd [#allocation8], %s54
      %s56 = sshll.u32 [#allocation9], 4
      %s57 = int_to_ptr.vmem [resolvable:$true] %s56
      %62 = dma.hbm_to_vmem [thread:$0]  %s6, 3072, %s57, [#allocation8], 192, 192, 12
    $region29: #{lstm_actor_critic.1} parent=1 // pred_fallthru
      _
    // Predicated region
    $region30: #{lstm_actor_critic.1} parent=1 // pred_check
      _
    $region31: #{lstm_actor_critic.1} parent=1 // pred_check_branch
      %64 = sbr.rel (0) target = $region33
    $region32: #{lstm_actor_critic.1} parent=1 // pred_region
      _
    $region33: #{lstm_actor_critic.1} parent=1 // pred_fallthru
      _
    // Predicated region
    $region34: #{lstm_actor_critic.1} parent=1 // pred_check
      _
    $region35: #{lstm_actor_critic.1} parent=1 // pred_check_branch
      %66 = sbr.rel (0) target = $region37
    $region36: #{lstm_actor_critic.1} parent=1 // pred_region
      %67 = dma.done [#allocation5], 8192
    $region37: #{lstm_actor_critic.1} parent=1 // pred_fallthru
      _
    // Predicated region
    $region38: #{lstm_actor_critic.1} parent=1 // pred_check
      _
    $region39: #{lstm_actor_critic.1} parent=1 // pred_check_branch
      %69 = sbr.rel (0) target = $region41
    $region40: #{lstm_actor_critic.1} parent=1 // pred_region
      %70 = dma.done [#allocation8], 4096
    $region41: #{lstm_actor_critic.1} parent=1 // pred_fallthru
      _
    // Predicated region
    $region42: #{lstm_actor_critic.1} parent=1 // pred_check
      _
    $region43: #{lstm_actor_critic.1} parent=1 // pred_check_branch
      %72 = sbr.rel (0) target = $region45
    $region44: #{lstm_actor_critic.1} parent=1 // pred_region
      %73 = dma.done [#allocation8], 3072
    $region45: #{lstm_actor_critic.1} parent=1 // pred_fallthru
      _
    %s75 = sld [smem:[#allocation3]]
    %v76 = vlaneseq
    %v77 = vand.u32 %v76, 127
    %v78 = vadd.s32 %v77, 128
    %v79 = vld [vmem:[%s1] sm:$0xff]
    %v80 = vld [vmem:[%s1 + $0x8] sm:$0xff]
    %v81 = vld [vmem:[%s1 + $0x10] sm:$0xff]
    %v82 = vld [vmem:[%s1 + $0x18] sm:$0xff]
    %v83 = vld [vmem:[%s1 + $0x20] sm:$0xff]
    %v84 = vld [vmem:[%s1 + $0x28] sm:$0xff]
    %v85 = vld [vmem:[%s1 + $0x30] sm:$0xff]
    %v86 = vld [vmem:[%s1 + $0x38] sm:$0xff]
    %87 = vset.pattern.permute.xlu0 0
    %88 = vperm.xlu0 %87, %v79
    %v89 = vpop.permute.xlu0 %88
    %90 = vset.pattern.permute.xlu0 0
    %91 = vperm.xlu0 %90, %v80
    %v92 = vpop.permute.xlu0 %91
    %93 = vset.pattern.permute.xlu0 0
    %94 = vperm.xlu0 %93, %v81
    %v95 = vpop.permute.xlu0 %94
    %96 = vset.pattern.permute.xlu0 0
    %97 = vperm.xlu0 %96, %v82
    %v98 = vpop.permute.xlu0 %97
    %99 = vset.pattern.permute.xlu0 0
    %100 = vperm.xlu0 %99, %v83
    %v101 = vpop.permute.xlu0 %100
    %102 = vset.pattern.permute.xlu0 0
    %103 = vperm.xlu0 %102, %v84
    %v104 = vpop.permute.xlu0 %103
    %105 = vset.pattern.permute.xlu0 0
    %106 = vperm.xlu0 %105, %v85
    %v107 = vpop.permute.xlu0 %106
    %108 = vset.pattern.permute.xlu0 0
    %109 = vperm.xlu0 %108, %v86
    %v110 = vpop.permute.xlu0 %109
    %vm111 = vcmp.eq.s32.totalorder %v77, %v89
    %vm112 = vcmp.eq.s32.totalorder %v78, %v89
    %vm113 = vcmp.eq.s32.totalorder %v77, %v92
    %vm114 = vcmp.eq.s32.totalorder %v78, %v92
    %vm115 = vcmp.eq.s32.totalorder %v77, %v95
    %vm116 = vcmp.eq.s32.totalorder %v78, %v95
    %vm117 = vcmp.eq.s32.totalorder %v77, %v98
    %vm118 = vcmp.eq.s32.totalorder %v78, %v98
    %vm119 = vcmp.eq.s32.totalorder %v77, %v101
    %vm120 = vcmp.eq.s32.totalorder %v78, %v101
    %vm121 = vcmp.eq.s32.totalorder %v77, %v104
    %vm122 = vcmp.eq.s32.totalorder %v78, %v104
    %vm123 = vcmp.eq.s32.totalorder %v77, %v107
    %vm124 = vcmp.eq.s32.totalorder %v78, %v107
    %vm125 = vcmp.eq.s32.totalorder %v77, %v110
    %vm126 = vcmp.eq.s32.totalorder %v78, %v110
    %v127 = vsel %vm111, 1, 0
    %v128 = vsel %vm112, 1, 0
    %v129 = vsel %vm113, 1, 0
    %v130 = vsel %vm114, 1, 0
    %v131 = vsel %vm115, 1, 0
    %v132 = vsel %vm116, 1, 0
    %v133 = vsel %vm117, 1, 0
    %v134 = vsel %vm118, 1, 0
    %v135 = vsel %vm119, 1, 0
    %v136 = vsel %vm120, 1, 0
    %v137 = vsel %vm121, 1, 0
    %v138 = vsel %vm122, 1, 0
    %v139 = vsel %vm123, 1, 0
    %v140 = vsel %vm124, 1, 0
    %v141 = vsel %vm125, 1, 0
    %v142 = vsel %vm126, 1, 0
    %v143 = vcvt.s32.f32 %v127
    %v144 = vcvt.s32.f32 %v128
    %v145 = vcvt.s32.f32 %v129
    %v146 = vcvt.s32.f32 %v130
    %v147 = vcvt.s32.f32 %v131
    %v148 = vcvt.s32.f32 %v132
    %v149 = vcvt.s32.f32 %v133
    %v150 = vcvt.s32.f32 %v134
    %v151 = vcvt.s32.f32 %v135
    %v152 = vcvt.s32.f32 %v136
    %v153 = vcvt.s32.f32 %v137
    %v154 = vcvt.s32.f32 %v138
    %v155 = vcvt.s32.f32 %v139
    %v156 = vcvt.s32.f32 %v140
    %v157 = vcvt.s32.f32 %v141
    %v158 = vcvt.s32.f32 %v142
    %v159 = vpack.c.bf16 %v145, %v143
    %v160 = vpack.c.bf16 %v146, %v144
    %v161 = vpack.c.bf16 %v149, %v147
    %v162 = vpack.c.bf16 %v150, %v148
    %v163 = vpack.c.bf16 %v153, %v151
    %v164 = vpack.c.bf16 %v154, %v152
    %v165 = vpack.c.bf16 %v157, %v155
    %v166 = vpack.c.bf16 %v158, %v156
    %v167 = vld [vmem:[#allocation4] sm:$0xff]
    %v168 = vld [vmem:[#allocation4 + $0x8] sm:$0xff]
    %v169 = vld [vmem:[#allocation4 + $0x10] sm:$0xff]
    %v170 = vld [vmem:[#allocation4 + $0x18] sm:$0xff]
    %v171 = vld [vmem:[#allocation4 + $0x20] sm:$0xff]
    %v172 = vld [vmem:[#allocation4 + $0x28] sm:$0xff]
    %v173 = vld [vmem:[#allocation4 + $0x30] sm:$0xff]
    %v174 = vld [vmem:[#allocation4 + $0x38] sm:$0xff]
    %v175 = vld [vmem:[#allocation4 + $0x40] sm:$0xff]
    %v176 = vld [vmem:[#allocation4 + $0x48] sm:$0xff]
    %v177 = vld [vmem:[#allocation4 + $0x50] sm:$0xff]
    %v178 = vld [vmem:[#allocation4 + $0x58] sm:$0xff]
    %v179 = vld [vmem:[#allocation4 + $0x60] sm:$0xff]
    %v180 = vld [vmem:[#allocation4 + $0x68] sm:$0xff]
    %v181 = vld [vmem:[#allocation4 + $0x70] sm:$0xff]
    %v182 = vld [vmem:[#allocation4 + $0x78] sm:$0xff]
    %v183 = vld [vmem:[#allocation4 + $0x80] sm:$0xff]
    %v184 = vld [vmem:[#allocation4 + $0x88] sm:$0xff]
    %v185 = vld [vmem:[#allocation4 + $0x90] sm:$0xff]
    %v186 = vld [vmem:[#allocation4 + $0x98] sm:$0xff]
    %v187 = vld [vmem:[#allocation4 + $0xa0] sm:$0xff]
    %v188 = vld [vmem:[#allocation4 + $0xa8] sm:$0xff]
    %v189 = vld [vmem:[#allocation4 + $0xb0] sm:$0xff]
    %v190 = vld [vmem:[#allocation4 + $0xb8] sm:$0xff]
    %v191 = vld [vmem:[#allocation4 + $0xc0] sm:$0xff]
    %v192 = vld [vmem:[#allocation4 + $0xc8] sm:$0xff]
    %v193 = vld [vmem:[#allocation4 + $0xd0] sm:$0xff]
    %v194 = vld [vmem:[#allocation4 + $0xd8] sm:$0xff]
    %v195 = vld [vmem:[#allocation4 + $0xe0] sm:$0xff]
    %v196 = vld [vmem:[#allocation4 + $0xe8] sm:$0xff]
    %v197 = vld [vmem:[#allocation4 + $0xf0] sm:$0xff]
    %v198 = vld [vmem:[#allocation4 + $0xf8] sm:$0xff]
    %v199 = vld [vmem:[#allocation4 + $0x100] sm:$0xff]
    %v200 = vld [vmem:[#allocation4 + $0x108] sm:$0xff]
    %v201 = vld [vmem:[#allocation4 + $0x110] sm:$0xff]
    %v202 = vld [vmem:[#allocation4 + $0x118] sm:$0xff]
    %v203 = vld [vmem:[#allocation4 + $0x120] sm:$0xff]
    %v204 = vld [vmem:[#allocation4 + $0x128] sm:$0xff]
    %v205 = vld [vmem:[#allocation4 + $0x130] sm:$0xff]
    %v206 = vld [vmem:[#allocation4 + $0x138] sm:$0xff]
    %v207 = vld [vmem:[#allocation4 + $0x140] sm:$0xff]
    %v208 = vld [vmem:[#allocation4 + $0x148] sm:$0xff]
    %v209 = vld [vmem:[#allocation4 + $0x150] sm:$0xff]
    %v210 = vld [vmem:[#allocation4 + $0x158] sm:$0xff]
    %v211 = vld [vmem:[#allocation4 + $0x160] sm:$0xff]
    %v212 = vld [vmem:[#allocation4 + $0x168] sm:$0xff]
    %v213 = vld [vmem:[#allocation4 + $0x170] sm:$0xff]
    %v214 = vld [vmem:[#allocation4 + $0x178] sm:$0xff]
    %v215 = vld [vmem:[#allocation4 + $0x180] sm:$0xff]
    %v216 = vld [vmem:[#allocation4 + $0x188] sm:$0xff]
    %v217 = vld [vmem:[#allocation4 + $0x190] sm:$0xff]
    %v218 = vld [vmem:[#allocation4 + $0x198] sm:$0xff]
    %v219 = vld [vmem:[#allocation4 + $0x1a0] sm:$0xff]
    %v220 = vld [vmem:[#allocation4 + $0x1a8] sm:$0xff]
    %v221 = vld [vmem:[#allocation4 + $0x1b0] sm:$0xff]
    %v222 = vld [vmem:[#allocation4 + $0x1b8] sm:$0xff]
    %v223 = vld [vmem:[#allocation4 + $0x1c0] sm:$0xff]
    %v224 = vld [vmem:[#allocation4 + $0x1c8] sm:$0xff]
    %v225 = vld [vmem:[#allocation4 + $0x1d0] sm:$0xff]
    %v226 = vld [vmem:[#allocation4 + $0x1d8] sm:$0xff]
    %v227 = vld [vmem:[#allocation4 + $0x1e0] sm:$0xff]
    %v228 = vld [vmem:[#allocation4 + $0x1e8] sm:$0xff]
    %v229 = vld [vmem:[#allocation4 + $0x1f0] sm:$0xff]
    %v230 = vld [vmem:[#allocation4 + $0x1f8] sm:$0xff]
    %v231 = vld [vmem:[%s5] sm:$0xf]
    %v233 = vlaneseq
    %v234 = vshrl.u32 %v233, 7
    %v235 = vsub.s32 0, %v234
    %v236 = vrot.slane %v231, %v235
    %v237 = vlaneseq
    %v238 = vshrl.u32 %v237, 7
    %v239 = vsub.s32 1, %v238
    %v240 = vrot.slane %v231, %v239
    %v241 = vlaneseq
    %v242 = vshrl.u32 %v241, 7
    %v243 = vsub.s32 2, %v242
    %v244 = vrot.slane %v231, %v243
    %v245 = vlaneseq
    %v246 = vshrl.u32 %v245, 7
    %v247 = vsub.s32 3, %v246
    %v248 = vrot.slane %v231, %v247
    %v317 = vunpack.c.l.b16 %v167
    %v318 = vunpack.c.h.b16 %v167
    %v319 = vunpack.c.l.b16 %v168
    %v320 = vunpack.c.h.b16 %v168
    %v321 = vunpack.c.l.b16 %v169
    %v322 = vunpack.c.h.b16 %v169
    %v323 = vunpack.c.l.b16 %v170
    %v324 = vunpack.c.h.b16 %v170
    %v325 = vunpack.c.l.b16 %v171
    %v326 = vunpack.c.h.b16 %v171
    %v327 = vunpack.c.l.b16 %v172
    %v328 = vunpack.c.h.b16 %v172
    %v329 = vunpack.c.l.b16 %v173
    %v330 = vunpack.c.h.b16 %v173
    %v331 = vunpack.c.l.b16 %v174
    %v332 = vunpack.c.h.b16 %v174
    %v333 = vunpack.c.l.b16 %v175
    %v334 = vunpack.c.h.b16 %v175
    %v335 = vunpack.c.l.b16 %v176
    %v336 = vunpack.c.h.b16 %v176
    %v337 = vunpack.c.l.b16 %v177
    %v338 = vunpack.c.h.b16 %v177
    %v339 = vunpack.c.l.b16 %v178
    %v340 = vunpack.c.h.b16 %v178
    %v341 = vunpack.c.l.b16 %v179
    %v342 = vunpack.c.h.b16 %v179
    %v343 = vunpack.c.l.b16 %v180
    %v344 = vunpack.c.h.b16 %v180
    %v345 = vunpack.c.l.b16 %v181
    %v346 = vunpack.c.h.b16 %v181
    %v347 = vunpack.c.l.b16 %v182
    %v348 = vunpack.c.h.b16 %v182
    %v349 = vunpack.c.l.b16 %v183
    %v350 = vunpack.c.h.b16 %v183
    %v351 = vunpack.c.l.b16 %v184
    %v352 = vunpack.c.h.b16 %v184
    %v353 = vunpack.c.l.b16 %v185
    %v354 = vunpack.c.h.b16 %v185
    %v355 = vunpack.c.l.b16 %v186
    %v356 = vunpack.c.h.b16 %v186
    %v357 = vunpack.c.l.b16 %v187
    %v358 = vunpack.c.h.b16 %v187
    %v359 = vunpack.c.l.b16 %v188
    %v360 = vunpack.c.h.b16 %v188
    %v361 = vunpack.c.l.b16 %v189
    %v362 = vunpack.c.h.b16 %v189
    %v363 = vunpack.c.l.b16 %v190
    %v364 = vunpack.c.h.b16 %v190
    %v365 = vunpack.c.l.b16 %v191
    %v366 = vunpack.c.h.b16 %v191
    %v367 = vunpack.c.l.b16 %v192
    %v368 = vunpack.c.h.b16 %v192
    %v369 = vunpack.c.l.b16 %v193
    %v370 = vunpack.c.h.b16 %v193
    %v371 = vunpack.c.l.b16 %v194
    %v372 = vunpack.c.h.b16 %v194
    %v373 = vunpack.c.l.b16 %v195
    %v374 = vunpack.c.h.b16 %v195
    %v375 = vunpack.c.l.b16 %v196
    %v376 = vunpack.c.h.b16 %v196
    %v377 = vunpack.c.l.b16 %v197
    %v378 = vunpack.c.h.b16 %v197
    %v379 = vunpack.c.l.b16 %v198
    %v380 = vunpack.c.h.b16 %v198
    %v381 = vunpack.c.l.b16 %v199
    %v382 = vunpack.c.h.b16 %v199
    %v383 = vunpack.c.l.b16 %v200
    %v384 = vunpack.c.h.b16 %v200
    %v385 = vunpack.c.l.b16 %v201
    %v386 = vunpack.c.h.b16 %v201
    %v387 = vunpack.c.l.b16 %v202
    %v388 = vunpack.c.h.b16 %v202
    %v389 = vunpack.c.l.b16 %v203
    %v390 = vunpack.c.h.b16 %v203
    %v391 = vunpack.c.l.b16 %v204
    %v392 = vunpack.c.h.b16 %v204
    %v393 = vunpack.c.l.b16 %v205
    %v394 = vunpack.c.h.b16 %v205
    %v395 = vunpack.c.l.b16 %v206
    %v396 = vunpack.c.h.b16 %v206
    %v397 = vunpack.c.l.b16 %v207
    %v398 = vunpack.c.h.b16 %v207
    %v399 = vunpack.c.l.b16 %v208
    %v400 = vunpack.c.h.b16 %v208
    %v401 = vunpack.c.l.b16 %v209
    %v402 = vunpack.c.h.b16 %v209
    %v403 = vunpack.c.l.b16 %v210
    %v404 = vunpack.c.h.b16 %v210
    %v405 = vunpack.c.l.b16 %v211
    %v406 = vunpack.c.h.b16 %v211
    %v407 = vunpack.c.l.b16 %v212
    %v408 = vunpack.c.h.b16 %v212
    %v409 = vunpack.c.l.b16 %v213
    %v410 = vunpack.c.h.b16 %v213
    %v411 = vunpack.c.l.b16 %v214
    %v412 = vunpack.c.h.b16 %v214
    %v413 = vunpack.c.l.b16 %v215
    %v414 = vunpack.c.h.b16 %v215
    %v415 = vunpack.c.l.b16 %v216
    %v416 = vunpack.c.h.b16 %v216
    %v417 = vunpack.c.l.b16 %v217
    %v418 = vunpack.c.h.b16 %v217
    %v419 = vunpack.c.l.b16 %v218
    %v420 = vunpack.c.h.b16 %v218
    %v421 = vunpack.c.l.b16 %v219
    %v422 = vunpack.c.h.b16 %v219
    %v423 = vunpack.c.l.b16 %v220
    %v424 = vunpack.c.h.b16 %v220
    %v425 = vunpack.c.l.b16 %v221
    %v426 = vunpack.c.h.b16 %v221
    %v427 = vunpack.c.l.b16 %v222
    %v428 = vunpack.c.h.b16 %v222
    %v429 = vunpack.c.l.b16 %v223
    %v430 = vunpack.c.h.b16 %v223
    %v431 = vunpack.c.l.b16 %v224
    %v432 = vunpack.c.h.b16 %v224
    %v433 = vunpack.c.l.b16 %v225
    %v434 = vunpack.c.h.b16 %v225
    %v435 = vunpack.c.l.b16 %v226
    %v436 = vunpack.c.h.b16 %v226
    %v437 = vunpack.c.l.b16 %v227
    %v438 = vunpack.c.h.b16 %v227
    %v439 = vunpack.c.l.b16 %v228
    %v440 = vunpack.c.h.b16 %v228
    %v441 = vunpack.c.l.b16 %v229
    %v442 = vunpack.c.h.b16 %v229
    %v443 = vunpack.c.l.b16 %v230
    %v444 = vunpack.c.h.b16 %v230
    %v445 = vpack.c.b16 %v321, %v317
    %v446 = vpack.c.b16 %v322, %v318
    %v447 = vpack.c.b16 %v323, %v319
    %v448 = vpack.c.b16 %v324, %v320
    %v449 = vpack.c.b16 %v329, %v325
    %v450 = vpack.c.b16 %v330, %v326
    %v451 = vpack.c.b16 %v331, %v327
    %v452 = vpack.c.b16 %v332, %v328
    %v453 = vpack.c.b16 %v337, %v333
    %v454 = vpack.c.b16 %v338, %v334
    %v455 = vpack.c.b16 %v339, %v335
    %v456 = vpack.c.b16 %v340, %v336
    %v457 = vpack.c.b16 %v345, %v341
    %v458 = vpack.c.b16 %v346, %v342
    %v459 = vpack.c.b16 %v347, %v343
    %v460 = vpack.c.b16 %v348, %v344
    %v461 = vpack.c.b16 %v353, %v349
    %v462 = vpack.c.b16 %v354, %v350
    %v463 = vpack.c.b16 %v355, %v351
    %v464 = vpack.c.b16 %v356, %v352
    %v465 = vpack.c.b16 %v361, %v357
    %v466 = vpack.c.b16 %v362, %v358
    %v467 = vpack.c.b16 %v363, %v359
    %v468 = vpack.c.b16 %v364, %v360
    %v469 = vpack.c.b16 %v369, %v365
    %v470 = vpack.c.b16 %v370, %v366
    %v471 = vpack.c.b16 %v371, %v367
    %v472 = vpack.c.b16 %v372, %v368
    %v473 = vpack.c.b16 %v377, %v373
    %v474 = vpack.c.b16 %v378, %v374
    %v475 = vpack.c.b16 %v379, %v375
    %v476 = vpack.c.b16 %v380, %v376
    %v477 = vpack.c.b16 %v385, %v381
    %v478 = vpack.c.b16 %v386, %v382
    %v479 = vpack.c.b16 %v387, %v383
    %v480 = vpack.c.b16 %v388, %v384
    %v481 = vpack.c.b16 %v393, %v389
    %v482 = vpack.c.b16 %v394, %v390
    %v483 = vpack.c.b16 %v395, %v391
    %v484 = vpack.c.b16 %v396, %v392
    %v485 = vpack.c.b16 %v401, %v397
    %v486 = vpack.c.b16 %v402, %v398
    %v487 = vpack.c.b16 %v403, %v399
    %v488 = vpack.c.b16 %v404, %v400
    %v489 = vpack.c.b16 %v409, %v405
    %v490 = vpack.c.b16 %v410, %v406
    %v491 = vpack.c.b16 %v411, %v407
    %v492 = vpack.c.b16 %v412, %v408
    %v493 = vpack.c.b16 %v417, %v413
    %v494 = vpack.c.b16 %v418, %v414
    %v495 = vpack.c.b16 %v419, %v415
    %v496 = vpack.c.b16 %v420, %v416
    %v497 = vpack.c.b16 %v425, %v421
    %v498 = vpack.c.b16 %v426, %v422
    %v499 = vpack.c.b16 %v427, %v423
    %v500 = vpack.c.b16 %v428, %v424
    %v501 = vpack.c.b16 %v433, %v429
    %v502 = vpack.c.b16 %v434, %v430
    %v503 = vpack.c.b16 %v435, %v431
    %v504 = vpack.c.b16 %v436, %v432
    %v505 = vpack.c.b16 %v441, %v437
    %v506 = vpack.c.b16 %v442, %v438
    %v507 = vpack.c.b16 %v443, %v439
    %v508 = vpack.c.b16 %v444, %v440
    %573 = vmatprep.subr.bf16.mxu0 %v474
    %574 = vmatpush1.bf16.msra.mxu0 %v473
    %575 = vmatprep.subr.bf16.mxu0 %v470
    %576 = vmatpush1.bf16.msra.mxu0 %v469
    %577 = vmatprep.subr.bf16.mxu0 %v466
    %578 = vmatpush1.bf16.msra.mxu0 %v465
    %579 = vmatprep.subr.bf16.mxu0 %v462
    %580 = vmatpush1.bf16.msra.mxu0 %v461
    %581 = vmatprep.subr.bf16.mxu0 %v458
    %582 = vmatpush1.bf16.msra.mxu0 %v457
    %583 = vmatprep.subr.bf16.mxu0 %v454
    %584 = vmatpush1.bf16.msra.mxu0 %v453
    %585 = vmatprep.subr.bf16.mxu0 %v450
    %586 = vmatpush1.bf16.msra.mxu0 %v449
    %587 = vmatprep.subr.bf16.mxu0 %v446
    %588 = vmatpush1.bf16.msra.mxu0 %v445
    %589 = vmatprep.subr.bf16.mxu0 %v506
    %590 = vmatpush2.bf16.msra.mxu0 %v505
    %591 = vmatprep.subr.bf16.mxu0 %v502
    %592 = vmatpush2.bf16.msra.mxu0 %v501
    %593 = vmatprep.subr.bf16.mxu0 %v498
    %594 = vmatpush2.bf16.msra.mxu0 %v497
    %595 = vmatprep.subr.bf16.mxu0 %v494
    %596 = vmatpush2.bf16.msra.mxu0 %v493
    %597 = vmatprep.subr.bf16.mxu0 %v490
    %598 = vmatpush2.bf16.msra.mxu0 %v489
    %599 = vmatprep.subr.bf16.mxu0 %v486
    %600 = vmatpush2.bf16.msra.mxu0 %v485
    %601 = vmatprep.subr.bf16.mxu0 %v482
    %602 = vmatpush2.bf16.msra.mxu0 %v481
    %603 = vmatprep.subr.bf16.mxu0 %v478
    %604 = vmatpush2.bf16.msra.mxu0 %v477
    %605 = vmatprep.mubr.bf16.mxu0 %v160
    %606 = vmatmul.mubr.bf16.gmra.mxu0 %v159
    %v607 = vpop.f32.mrf.mxu0
    %v608 = vadd.f32 %v236, %v607
    %v609 = vpop.f32.mrf.mxu0
    %v610 = vadd.f32 %v240, %v609
    %v611 = vpop.f32.mrf.mxu0
    %v612 = vadd.f32 %v236, %v611
    %v613 = vpop.f32.mrf.mxu0
    %v614 = vadd.f32 %v240, %v613
    %615 = vmatprep.mubr.bf16.mxu0 %v162
    %616 = vmatmul.mubr.bf16.gmra.mxu0 %v161
    %v617 = vpop.f32.mrf.mxu0
    %v618 = vadd.f32 %v236, %v617
    %v619 = vpop.f32.mrf.mxu0
    %v620 = vadd.f32 %v240, %v619
    %v621 = vpop.f32.mrf.mxu0
    %v622 = vadd.f32 %v236, %v621
    %v623 = vpop.f32.mrf.mxu0
    %v624 = vadd.f32 %v240, %v623
    %625 = vmatprep.mubr.bf16.mxu0 %v164
    %626 = vmatmul.mubr.bf16.gmra.mxu0 %v163
    %v627 = vpop.f32.mrf.mxu0
    %v628 = vadd.f32 %v236, %v627
    %v629 = vpop.f32.mrf.mxu0
    %v630 = vadd.f32 %v240, %v629
    %v631 = vpop.f32.mrf.mxu0
    %v632 = vadd.f32 %v236, %v631
    %v633 = vpop.f32.mrf.mxu0
    %v634 = vadd.f32 %v240, %v633
    %635 = vmatprep.mubr.bf16.mxu0 %v166
    %636 = vmatmul.mubr.bf16.gmra.mxu0 %v165
    %v637 = vpop.f32.mrf.mxu0
    %v638 = vadd.f32 %v236, %v637
    %v639 = vpop.f32.mrf.mxu0
    %v640 = vadd.f32 %v240, %v639
    %v641 = vpop.f32.mrf.mxu0
    %v642 = vadd.f32 %v236, %v641
    %v643 = vpop.f32.mrf.mxu0
    %v644 = vadd.f32 %v240, %v643
    %645 = vdwg.mxu0
    %646 = vmatprep.subr.bf16.mxu0 %v476
    %647 = vmatpush1.bf16.msra.mxu0 %v475
    %648 = vmatprep.subr.bf16.mxu0 %v472
    %649 = vmatpush1.bf16.msra.mxu0 %v471
    %650 = vmatprep.subr.bf16.mxu0 %v468
    %651 = vmatpush1.bf16.msra.mxu0 %v467
    %652 = vmatprep.subr.bf16.mxu0 %v464
    %653 = vmatpush1.bf16.msra.mxu0 %v463
    %654 = vmatprep.subr.bf16.mxu0 %v460
    %655 = vmatpush1.bf16.msra.mxu0 %v459
    %656 = vmatprep.subr.bf16.mxu0 %v456
    %657 = vmatpush1.bf16.msra.mxu0 %v455
    %658 = vmatprep.subr.bf16.mxu0 %v452
    %659 = vmatpush1.bf16.msra.mxu0 %v451
    %660 = vmatprep.subr.bf16.mxu0 %v448
    %661 = vmatpush1.bf16.msra.mxu0 %v447
    %662 = vmatprep.subr.bf16.mxu0 %v508
    %663 = vmatpush2.bf16.msra.mxu0 %v507
    %664 = vmatprep.subr.bf16.mxu0 %v504
    %665 = vmatpush2.bf16.msra.mxu0 %v503
    %666 = vmatprep.subr.bf16.mxu0 %v500
    %667 = vmatpush2.bf16.msra.mxu0 %v499
    %668 = vmatprep.subr.bf16.mxu0 %v496
    %669 = vmatpush2.bf16.msra.mxu0 %v495
    %670 = vmatprep.subr.bf16.mxu0 %v492
    %671 = vmatpush2.bf16.msra.mxu0 %v491
    %672 = vmatprep.subr.bf16.mxu0 %v488
    %673 = vmatpush2.bf16.msra.mxu0 %v487
    %674 = vmatprep.subr.bf16.mxu0 %v484
    %675 = vmatpush2.bf16.msra.mxu0 %v483
    %676 = vmatprep.subr.bf16.mxu0 %v480
    %677 = vmatpush2.bf16.msra.mxu0 %v479
    %678 = vmatprep.mubr.bf16.mxu0 %v160
    %679 = vmatmul.mubr.bf16.gmra.mxu0 %v159
    %v680 = vpop.f32.mrf.mxu0
    %v681 = vadd.f32 %v244, %v680
    %v682 = vpop.f32.mrf.mxu0
    %v683 = vadd.f32 %v248, %v682
    %v684 = vpop.f32.mrf.mxu0
    %v685 = vadd.f32 %v244, %v684
    %v686 = vpop.f32.mrf.mxu0
    %v687 = vadd.f32 %v248, %v686
    %688 = vmatprep.mubr.bf16.mxu0 %v162
    %689 = vmatmul.mubr.bf16.gmra.mxu0 %v161
    %v690 = vpop.f32.mrf.mxu0
    %v691 = vadd.f32 %v244, %v690
    %v692 = vpop.f32.mrf.mxu0
    %v693 = vadd.f32 %v248, %v692
    %v694 = vpop.f32.mrf.mxu0
    %v695 = vadd.f32 %v244, %v694
    %v696 = vpop.f32.mrf.mxu0
    %v697 = vadd.f32 %v248, %v696
    %698 = vmatprep.mubr.bf16.mxu0 %v164
    %699 = vmatmul.mubr.bf16.gmra.mxu0 %v163
    %v700 = vpop.f32.mrf.mxu0
    %v701 = vadd.f32 %v244, %v700
    %v702 = vpop.f32.mrf.mxu0
    %v703 = vadd.f32 %v248, %v702
    %v704 = vpop.f32.mrf.mxu0
    %v705 = vadd.f32 %v244, %v704
    %v706 = vpop.f32.mrf.mxu0
    %v707 = vadd.f32 %v248, %v706
    %708 = vmatprep.mubr.bf16.mxu0 %v166
    %709 = vmatmul.mubr.bf16.gmra.mxu0 %v165
    %v710 = vpop.f32.mrf.mxu0
    %v711 = vadd.f32 %v244, %v710
    %v712 = vpop.f32.mrf.mxu0
    %v713 = vadd.f32 %v248, %v712
    %v714 = vpop.f32.mrf.mxu0
    %v715 = vadd.f32 %v244, %v714
    %v716 = vpop.f32.mrf.mxu0
    %v717 = vadd.f32 %v248, %v716
    %718 = vdwg.mxu0
    %719 = vst [vmem:[#allocation2] sm:$0xff] %v608
    %720 = vst [vmem:[#allocation2 + $0x8] sm:$0xff] %v610
    %721 = vst [vmem:[#allocation2 + $0x10] sm:$0xff] %v681
    %722 = vst [vmem:[#allocation2 + $0x18] sm:$0xff] %v683
    %723 = vst [vmem:[#allocation2 + $0x20] sm:$0xff] %v612
    %724 = vst [vmem:[#allocation2 + $0x28] sm:$0xff] %v614
    %725 = vst [vmem:[#allocation2 + $0x30] sm:$0xff] %v685
    %726 = vst [vmem:[#allocation2 + $0x38] sm:$0xff] %v687
    %727 = vst [vmem:[#allocation2 + $0x40] sm:$0xff] %v618
    %728 = vst [vmem:[#allocation2 + $0x48] sm:$0xff] %v620
    %729 = vst [vmem:[#allocation2 + $0x50] sm:$0xff] %v691
    %730 = vst [vmem:[#allocation2 + $0x58] sm:$0xff] %v693
    %731 = vst [vmem:[#allocation2 + $0x60] sm:$0xff] %v622
    %732 = vst [vmem:[#allocation2 + $0x68] sm:$0xff] %v624
    %733 = vst [vmem:[#allocation2 + $0x70] sm:$0xff] %v695
    %734 = vst [vmem:[#allocation2 + $0x78] sm:$0xff] %v697
    %735 = vst [vmem:[#allocation2 + $0x80] sm:$0xff] %v628
    %736 = vst [vmem:[#allocation2 + $0x88] sm:$0xff] %v630
    %737 = vst [vmem:[#allocation2 + $0x90] sm:$0xff] %v701
    %738 = vst [vmem:[#allocation2 + $0x98] sm:$0xff] %v703
    %739 = vst [vmem:[#allocation2 + $0xa0] sm:$0xff] %v632
    %740 = vst [vmem:[#allocation2 + $0xa8] sm:$0xff] %v634
    %741 = vst [vmem:[#allocation2 + $0xb0] sm:$0xff] %v705
    %742 = vst [vmem:[#allocation2 + $0xb8] sm:$0xff] %v707
    %743 = vst [vmem:[#allocation2 + $0xc0] sm:$0xff] %v638
    %744 = vst [vmem:[#allocation2 + $0xc8] sm:$0xff] %v640
    %745 = vst [vmem:[#allocation2 + $0xd0] sm:$0xff] %v711
    %746 = vst [vmem:[#allocation2 + $0xd8] sm:$0xff] %v713
    %747 = vst [vmem:[#allocation2 + $0xe0] sm:$0xff] %v642
    %748 = vst [vmem:[#allocation2 + $0xe8] sm:$0xff] %v644
    %749 = vst [vmem:[#allocation2 + $0xf0] sm:$0xff] %v715
    %750 = vst [vmem:[#allocation2 + $0xf8] sm:$0xff] %v717
    %v751 = vld [vmem:[#allocation7] sm:$0xff]
    %v752 = vld [vmem:[#allocation7 + $0x8] sm:$0xff]
    %v753 = vld [vmem:[#allocation7 + $0x10] sm:$0xff]
    %v754 = vld [vmem:[#allocation7 + $0x18] sm:$0xff]
    %v755 = vld [vmem:[#allocation7 + $0x20] sm:$0xff]
    %v756 = vld [vmem:[#allocation7 + $0x28] sm:$0xff]
    %v757 = vld [vmem:[#allocation7 + $0x30] sm:$0xff]
    %v758 = vld [vmem:[#allocation7 + $0x38] sm:$0xff]
    %v759 = vld [vmem:[#allocation7 + $0x40] sm:$0xff]
    %v760 = vld [vmem:[#allocation7 + $0x48] sm:$0xff]
    %v761 = vld [vmem:[#allocation7 + $0x50] sm:$0xff]
    %v762 = vld [vmem:[#allocation7 + $0x58] sm:$0xff]
    %v763 = vld [vmem:[#allocation7 + $0x60] sm:$0xff]
    %v764 = vld [vmem:[#allocation7 + $0x68] sm:$0xff]
    %v765 = vld [vmem:[#allocation7 + $0x70] sm:$0xff]
    %v766 = vld [vmem:[#allocation7 + $0x78] sm:$0xff]
    %v767 = vld [vmem:[#allocation7 + $0x80] sm:$0xff]
    %v768 = vld [vmem:[#allocation7 + $0x88] sm:$0xff]
    %v769 = vld [vmem:[#allocation7 + $0x90] sm:$0xff]
    %v770 = vld [vmem:[#allocation7 + $0x98] sm:$0xff]
    %v771 = vld [vmem:[#allocation7 + $0xa0] sm:$0xff]
    %v772 = vld [vmem:[#allocation7 + $0xa8] sm:$0xff]
    %v773 = vld [vmem:[#allocation7 + $0xb0] sm:$0xff]
    %v774 = vld [vmem:[#allocation7 + $0xb8] sm:$0xff]
    %v775 = vld [vmem:[#allocation7 + $0xc0] sm:$0xff]
    %v776 = vld [vmem:[#allocation7 + $0xc8] sm:$0xff]
    %v777 = vld [vmem:[#allocation7 + $0xd0] sm:$0xff]
    %v778 = vld [vmem:[#allocation7 + $0xd8] sm:$0xff]
    %v779 = vld [vmem:[#allocation7 + $0xe0] sm:$0xff]
    %v780 = vld [vmem:[#allocation7 + $0xe8] sm:$0xff]
    %v781 = vld [vmem:[#allocation7 + $0xf0] sm:$0xff]
    %v782 = vld [vmem:[#allocation7 + $0xf8] sm:$0xff]
    %v783 = vld [vmem:[#allocation2] sm:$0xff]
    %v784 = vld [vmem:[#allocation2 + $0x8] sm:$0xff]
    %v785 = vld [vmem:[#allocation2 + $0x10] sm:$0xff]
    %v786 = vld [vmem:[#allocation2 + $0x18] sm:$0xff]
    %v819 = vunpack.c.l.b16 %v751
    %v820 = vunpack.c.h.b16 %v751
    %v821 = vunpack.c.l.b16 %v752
    %v822 = vunpack.c.h.b16 %v752
    %v823 = vunpack.c.l.b16 %v753
    %v824 = vunpack.c.h.b16 %v753
    %v825 = vunpack.c.l.b16 %v754
    %v826 = vunpack.c.h.b16 %v754
    %v827 = vunpack.c.l.b16 %v755
    %v828 = vunpack.c.h.b16 %v755
    %v829 = vunpack.c.l.b16 %v756
    %v830 = vunpack.c.h.b16 %v756
    %v831 = vunpack.c.l.b16 %v757
    %v832 = vunpack.c.h.b16 %v757
    %v833 = vunpack.c.l.b16 %v758
    %v834 = vunpack.c.h.b16 %v758
    %v835 = vunpack.c.l.b16 %v759
    %v836 = vunpack.c.h.b16 %v759
    %v837 = vunpack.c.l.b16 %v760
    %v838 = vunpack.c.h.b16 %v760
    %v839 = vunpack.c.l.b16 %v761
    %v840 = vunpack.c.h.b16 %v761
    %v841 = vunpack.c.l.b16 %v762
    %v842 = vunpack.c.h.b16 %v762
    %v843 = vunpack.c.l.b16 %v763
    %v844 = vunpack.c.h.b16 %v763
    %v845 = vunpack.c.l.b16 %v764
    %v846 = vunpack.c.h.b16 %v764
    %v847 = vunpack.c.l.b16 %v765
    %v848 = vunpack.c.h.b16 %v765
    %v849 = vunpack.c.l.b16 %v766
    %v850 = vunpack.c.h.b16 %v766
    %v851 = vunpack.c.l.b16 %v767
    %v852 = vunpack.c.h.b16 %v767
    %v853 = vunpack.c.l.b16 %v768
    %v854 = vunpack.c.h.b16 %v768
    %v855 = vunpack.c.l.b16 %v769
    %v856 = vunpack.c.h.b16 %v769
    %v857 = vunpack.c.l.b16 %v770
    %v858 = vunpack.c.h.b16 %v770
    %v859 = vunpack.c.l.b16 %v771
    %v860 = vunpack.c.h.b16 %v771
    %v861 = vunpack.c.l.b16 %v772
    %v862 = vunpack.c.h.b16 %v772
    %v863 = vunpack.c.l.b16 %v773
    %v864 = vunpack.c.h.b16 %v773
    %v865 = vunpack.c.l.b16 %v774
    %v866 = vunpack.c.h.b16 %v774
    %v867 = vunpack.c.l.b16 %v775
    %v868 = vunpack.c.h.b16 %v775
    %v869 = vunpack.c.l.b16 %v776
    %v870 = vunpack.c.h.b16 %v776
    %v871 = vunpack.c.l.b16 %v777
    %v872 = vunpack.c.h.b16 %v777
    %v873 = vunpack.c.l.b16 %v778
    %v874 = vunpack.c.h.b16 %v778
    %v875 = vunpack.c.l.b16 %v779
    %v876 = vunpack.c.h.b16 %v779
    %v877 = vunpack.c.l.b16 %v780
    %v878 = vunpack.c.h.b16 %v780
    %v879 = vunpack.c.l.b16 %v781
    %v880 = vunpack.c.h.b16 %v781
    %v881 = vunpack.c.l.b16 %v782
    %v882 = vunpack.c.h.b16 %v782
    %v883 = vpack.c.b16 %v823, %v819
    %v884 = vpack.c.b16 %v824, %v820
    %v885 = vpack.c.b16 %v825, %v821
    %v886 = vpack.c.b16 %v826, %v822
    %v887 = vpack.c.b16 %v831, %v827
    %v888 = vpack.c.b16 %v832, %v828
    %v889 = vpack.c.b16 %v833, %v829
    %v890 = vpack.c.b16 %v834, %v830
    %v891 = vpack.c.b16 %v839, %v835
    %v892 = vpack.c.b16 %v840, %v836
    %v893 = vpack.c.b16 %v841, %v837
    %v894 = vpack.c.b16 %v842, %v838
    %v895 = vpack.c.b16 %v847, %v843
    %v896 = vpack.c.b16 %v848, %v844
    %v897 = vpack.c.b16 %v849, %v845
    %v898 = vpack.c.b16 %v850, %v846
    %v899 = vpack.c.b16 %v855, %v851
    %v900 = vpack.c.b16 %v856, %v852
    %v901 = vpack.c.b16 %v857, %v853
    %v902 = vpack.c.b16 %v858, %v854
    %v903 = vpack.c.b16 %v863, %v859
    %v904 = vpack.c.b16 %v864, %v860
    %v905 = vpack.c.b16 %v865, %v861
    %v906 = vpack.c.b16 %v866, %v862
    %v907 = vpack.c.b16 %v871, %v867
    %v908 = vpack.c.b16 %v872, %v868
    %v909 = vpack.c.b16 %v873, %v869
    %v910 = vpack.c.b16 %v874, %v870
    %v911 = vpack.c.b16 %v879, %v875
    %v912 = vpack.c.b16 %v880, %v876
    %v913 = vpack.c.b16 %v881, %v877
    %v914 = vpack.c.b16 %v882, %v878
    %947 = vmatprep.subr.bf16.mxu0 %v912
    %948 = vmatpush1.bf16.msra.mxu0 %v911
    %949 = vmatprep.subr.bf16.mxu0 %v908
    %950 = vmatpush1.bf16.msra.mxu0 %v907
    %951 = vmatprep.subr.bf16.mxu0 %v904
    %952 = vmatpush1.bf16.msra.mxu0 %v903
    %953 = vmatprep.subr.bf16.mxu0 %v900
    %954 = vmatpush1.bf16.msra.mxu0 %v899
    %955 = vmatprep.subr.bf16.mxu0 %v896
    %956 = vmatpush1.bf16.msra.mxu0 %v895
    %957 = vmatprep.subr.bf16.mxu0 %v892
    %958 = vmatpush1.bf16.msra.mxu0 %v891
    %959 = vmatprep.subr.bf16.mxu0 %v888
    %960 = vmatpush1.bf16.msra.mxu0 %v887
    %961 = vmatprep.subr.bf16.mxu0 %v884
    %962 = vmatpush1.bf16.msra.mxu0 %v883
    %963 = vmatprep.subr.bf16.mxu0 0
    %964 = vmatpush2.bf16.msra.mxu0 0
    %965 = vmatprep.subr.bf16.mxu0 0
    %966 = vmatpush2.bf16.msra.mxu0 0
    %967 = vmatprep.subr.bf16.mxu0 0
    %968 = vmatpush2.bf16.msra.mxu0 0
    %969 = vmatprep.subr.bf16.mxu0 0
    %970 = vmatpush2.bf16.msra.mxu0 0
    %971 = vmatprep.subr.bf16.mxu0 0
    %972 = vmatpush2.bf16.msra.mxu0 0
    %973 = vmatprep.subr.bf16.mxu0 0
    %974 = vmatpush2.bf16.msra.mxu0 0
    %975 = vmatprep.subr.bf16.mxu0 0
    %976 = vmatpush2.bf16.msra.mxu0 0
    %977 = vmatprep.subr.bf16.mxu0 0
    %978 = vmatpush2.bf16.msra.mxu0 0
    %979 = vmatprep.mubr.bf16.mxu0 0
    %980 = vmatmul.mubr.bf16.gmra.mxu0 0
    %v981 = vpop.f32.mrf.mxu0
    %v982 = vadd.f32 0.0, %v981
    %v983 = vpop.f32.mrf.mxu0
    %v984 = vadd.f32 0.0, %v983
    %v985 = vpop.f32.mrf.mxu0
    %v986 = vpop.f32.mrf.mxu0
    %987 = vdwg.mxu0
    %988 = vmatprep.subr.bf16.mxu0 %v914
    %989 = vmatpush1.bf16.msra.mxu0 %v913
    %990 = vmatprep.subr.bf16.mxu0 %v910
    %991 = vmatpush1.bf16.msra.mxu0 %v909
    %992 = vmatprep.subr.bf16.mxu0 %v906
    %993 = vmatpush1.bf16.msra.mxu0 %v905
    %994 = vmatprep.subr.bf16.mxu0 %v902
    %995 = vmatpush1.bf16.msra.mxu0 %v901
    %996 = vmatprep.subr.bf16.mxu0 %v898
    %997 = vmatpush1.bf16.msra.mxu0 %v897
    %998 = vmatprep.subr.bf16.mxu0 %v894
    %999 = vmatpush1.bf16.msra.mxu0 %v893
    %1000 = vmatprep.subr.bf16.mxu0 %v890
    %1001 = vmatpush1.bf16.msra.mxu0 %v889
    %1002 = vmatprep.subr.bf16.mxu0 %v886
    %1003 = vmatpush1.bf16.msra.mxu0 %v885
    %1004 = vmatprep.subr.bf16.mxu0 0
    %1005 = vmatpush2.bf16.msra.mxu0 0
    %1006 = vmatprep.subr.bf16.mxu0 0
    %1007 = vmatpush2.bf16.msra.mxu0 0
    %1008 = vmatprep.subr.bf16.mxu0 0
    %1009 = vmatpush2.bf16.msra.mxu0 0
    %1010 = vmatprep.subr.bf16.mxu0 0
    %1011 = vmatpush2.bf16.msra.mxu0 0
    %1012 = vmatprep.subr.bf16.mxu0 0
    %1013 = vmatpush2.bf16.msra.mxu0 0
    %1014 = vmatprep.subr.bf16.mxu0 0
    %1015 = vmatpush2.bf16.msra.mxu0 0
    %1016 = vmatprep.subr.bf16.mxu0 0
    %1017 = vmatpush2.bf16.msra.mxu0 0
    %1018 = vmatprep.subr.bf16.mxu0 0
    %1019 = vmatpush2.bf16.msra.mxu0 0
    %1020 = vmatprep.mubr.bf16.mxu0 0
    %1021 = vmatmul.mubr.bf16.gmra.mxu0 0
    %v1022 = vpop.f32.mrf.mxu0
    %v1023 = vadd.f32 0.0, %v1022
    %v1024 = vpop.f32.mrf.mxu0
    %v1025 = vadd.f32 0.0, %v1024
    %v1026 = vpop.f32.mrf.mxu0
    %v1027 = vpop.f32.mrf.mxu0
    %1028 = vdwg.mxu0
    %v1029 = vadd.f32 %v783, %v982
    %v1030 = vadd.f32 %v784, %v984
    %v1031 = vadd.f32 %v785, %v1023
    %v1032 = vadd.f32 %v786, %v1025
    %v1033 = vmul.f32 %v1029, 0.5
    %v1034 = vtanh.pop %v1033
    %v1035 = vmul.f32 %v1034, 0.5
    %v1036 = vadd.f32 %v1035, 0.5
    %v1037 = vmul.f32 %v1030, 0.5
    %v1038 = vtanh.pop %v1037
    %v1039 = vmul.f32 %v1038, 0.5
    %v1040 = vadd.f32 %v1039, 0.5
    %v1041 = vtanh.pop %v1031
    %v1042 = vmul.f32 %v1032, 0.5
    %v1043 = vtanh.pop %v1042
    %v1044 = vmul.f32 %v1043, 0.5
    %v1045 = vadd.f32 %v1044, 0.5
    %v1046 = vmul.f32 %v1040, 0.0
    %v1047 = vmul.f32 %v1036, %v1041
    %v1048 = vadd.f32 %v1046, %v1047
    %v1049 = vtanh.pop %v1048
    %v1050 = vmul.f32 %v1045, %v1049
    %p1051 = scmp.gt.s32.totalorder %s75, 0
    %s1052 = scalar_select %p1051, 1, 0
    %v1053 = vstv %s1052
    %vm1054 = vcmp.eq.s32.totalorder %v1053, 1
    %v1055 = vsel %vm1054, %v1050, 0.0
    %v1056 = vsel %vm1054, %v1048, 0.0
    %v1057 = vld [vmem:[#allocation2 + $0x20] sm:$0xff]
    %v1058 = vld [vmem:[#allocation2 + $0x28] sm:$0xff]
    %v1059 = vld [vmem:[#allocation2 + $0x30] sm:$0xff]
    %v1060 = vld [vmem:[#allocation2 + $0x38] sm:$0xff]
    %v1061 = vpack.c.bf16 %v1055, %v1055
    %1062 = vmatprep.subr.bf16.mxu0 %v912
    %1063 = vmatpush1.bf16.msra.mxu0 %v911
    %1064 = vmatprep.subr.bf16.mxu0 %v908
    %1065 = vmatpush1.bf16.msra.mxu0 %v907
    %1066 = vmatprep.subr.bf16.mxu0 %v904
    %1067 = vmatpush1.bf16.msra.mxu0 %v903
    %1068 = vmatprep.subr.bf16.mxu0 %v900
    %1069 = vmatpush1.bf16.msra.mxu0 %v899
    %1070 = vmatprep.subr.bf16.mxu0 %v896
    %1071 = vmatpush1.bf16.msra.mxu0 %v895
    %1072 = vmatprep.subr.bf16.mxu0 %v892
    %1073 = vmatpush1.bf16.msra.mxu0 %v891
    %1074 = vmatprep.subr.bf16.mxu0 %v888
    %1075 = vmatpush1.bf16.msra.mxu0 %v887
    %1076 = vmatprep.subr.bf16.mxu0 %v884
    %1077 = vmatpush1.bf16.msra.mxu0 %v883
    %1078 = vmatprep.subr.bf16.mxu0 0
    %1079 = vmatpush2.bf16.msra.mxu0 0
    %1080 = vmatprep.subr.bf16.mxu0 0
    %1081 = vmatpush2.bf16.msra.mxu0 0
    %1082 = vmatprep.subr.bf16.mxu0 0
    %1083 = vmatpush2.bf16.msra.mxu0 0
    %1084 = vmatprep.subr.bf16.mxu0 0
    %1085 = vmatpush2.bf16.msra.mxu0 0
    %1086 = vmatprep.subr.bf16.mxu0 0
    %1087 = vmatpush2.bf16.msra.mxu0 0
    %1088 = vmatprep.subr.bf16.mxu0 0
    %1089 = vmatpush2.bf16.msra.mxu0 0
    %1090 = vmatprep.subr.bf16.mxu0 0
    %1091 = vmatpush2.bf16.msra.mxu0 0
    %1092 = vmatprep.subr.bf16.mxu0 0
    %1093 = vmatpush2.bf16.msra.mxu0 0
    %1094 = vmatprep.mubr.bf16.mxu0 0
    %1095 = vmatmul.mubr.bf16.gmra.mxu0 %v1061
    %v1096 = vpop.f32.mrf.mxu0
    %v1097 = vadd.f32 0.0, %v1096
    %v1098 = vpop.f32.mrf.mxu0
    %v1099 = vadd.f32 0.0, %v1098
    %v1100 = vpop.f32.mrf.mxu0
    %v1101 = vpop.f32.mrf.mxu0
    %1102 = vdwg.mxu0
    %1103 = vmatprep.subr.bf16.mxu0 %v914
    %1104 = vmatpush1.bf16.msra.mxu0 %v913
    %1105 = vmatprep.subr.bf16.mxu0 %v910
    %1106 = vmatpush1.bf16.msra.mxu0 %v909
    %1107 = vmatprep.subr.bf16.mxu0 %v906
    %1108 = vmatpush1.bf16.msra.mxu0 %v905
    %1109 = vmatprep.subr.bf16.mxu0 %v902
    %1110 = vmatpush1.bf16.msra.mxu0 %v901
    %1111 = vmatprep.subr.bf16.mxu0 %v898
    %1112 = vmatpush1.bf16.msra.mxu0 %v897
    %1113 = vmatprep.subr.bf16.mxu0 %v894
    %1114 = vmatpush1.bf16.msra.mxu0 %v893
    %1115 = vmatprep.subr.bf16.mxu0 %v890
    %1116 = vmatpush1.bf16.msra.mxu0 %v889
    %1117 = vmatprep.subr.bf16.mxu0 %v886
    %1118 = vmatpush1.bf16.msra.mxu0 %v885
    %1119 = vmatprep.subr.bf16.mxu0 0
    %1120 = vmatpush2.bf16.msra.mxu0 0
    %1121 = vmatprep.subr.bf16.mxu0 0
    %1122 = vmatpush2.bf16.msra.mxu0 0
    %1123 = vmatprep.subr.bf16.mxu0 0
    %1124 = vmatpush2.bf16.msra.mxu0 0
    %1125 = vmatprep.subr.bf16.mxu0 0
    %1126 = vmatpush2.bf16.msra.mxu0 0
    %1127 = vmatprep.subr.bf16.mxu0 0
    %1128 = vmatpush2.bf16.msra.mxu0 0
    %1129 = vmatprep.subr.bf16.mxu0 0
    %1130 = vmatpush2.bf16.msra.mxu0 0
    %1131 = vmatprep.subr.bf16.mxu0 0
    %1132 = vmatpush2.bf16.msra.mxu0 0
    %1133 = vmatprep.subr.bf16.mxu0 0
    %1134 = vmatpush2.bf16.msra.mxu0 0
    %1135 = vmatprep.mubr.bf16.mxu0 0
    %1136 = vmatmul.mubr.bf16.gmra.mxu0 %v1061
    %v1137 = vpop.f32.mrf.mxu0
    %v1138 = vadd.f32 0.0, %v1137
    %v1139 = vpop.f32.mrf.mxu0
    %v1140 = vadd.f32 0.0, %v1139
    %v1141 = vpop.f32.mrf.mxu0
    %v1142 = vpop.f32.mrf.mxu0
    %1143 = vdwg.mxu0
    %v1144 = vadd.f32 %v1057, %v1097
    %v1145 = vadd.f32 %v1058, %v1099
    %v1146 = vadd.f32 %v1059, %v1138
    %v1147 = vadd.f32 %v1060, %v1140
    %v1148 = vmul.f32 %v1144, 0.5
    %v1149 = vtanh.pop %v1148
    %v1150 = vmul.f32 %v1149, 0.5
    %v1151 = vadd.f32 %v1150, 0.5
    %v1152 = vmul.f32 %v1145, 0.5
    %v1153 = vtanh.pop %v1152
    %v1154 = vmul.f32 %v1153, 0.5
    %v1155 = vadd.f32 %v1154, 0.5
    %v1156 = vtanh.pop %v1146
    %v1157 = vmul.f32 %v1147, 0.5
    %v1158 = vtanh.pop %v1157
    %v1159 = vmul.f32 %v1158, 0.5
    %v1160 = vadd.f32 %v1159, 0.5
    %v1161 = vmul.f32 %v1155, %v1056
    %v1162 = vmul.f32 %v1151, %v1156
    %v1163 = vadd.f32 %v1161, %v1162
    %v1164 = vtanh.pop %v1163
    %v1165 = vmul.f32 %v1160, %v1164
    %p1166 = scmp.gt.s32.totalorder %s75, 1
    %s1167 = scalar_select %p1166, 1, 0
    %v1168 = vstv %s1167
    %vm1169 = vcmp.eq.s32.totalorder %v1168, 1
    %v1170 = vsel %vm1169, %v1165, %v1055
    %v1171 = vsel %vm1169, %v1163, %v1056
    %v1172 = vld [vmem:[#allocation2 + $0x40] sm:$0xff]
    %v1173 = vld [vmem:[#allocation2 + $0x48] sm:$0xff]
    %v1174 = vld [vmem:[#allocation2 + $0x50] sm:$0xff]
    %v1175 = vld [vmem:[#allocation2 + $0x58] sm:$0xff]
    %v1176 = vpack.c.bf16 %v1170, %v1170
    %1177 = vmatprep.subr.bf16.mxu0 %v912
    %1178 = vmatpush1.bf16.msra.mxu0 %v911
    %1179 = vmatprep.subr.bf16.mxu0 %v908
    %1180 = vmatpush1.bf16.msra.mxu0 %v907
    %1181 = vmatprep.subr.bf16.mxu0 %v904
    %1182 = vmatpush1.bf16.msra.mxu0 %v903
    %1183 = vmatprep.subr.bf16.mxu0 %v900
    %1184 = vmatpush1.bf16.msra.mxu0 %v899
    %1185 = vmatprep.subr.bf16.mxu0 %v896
    %1186 = vmatpush1.bf16.msra.mxu0 %v895
    %1187 = vmatprep.subr.bf16.mxu0 %v892
    %1188 = vmatpush1.bf16.msra.mxu0 %v891
    %1189 = vmatprep.subr.bf16.mxu0 %v888
    %1190 = vmatpush1.bf16.msra.mxu0 %v887
    %1191 = vmatprep.subr.bf16.mxu0 %v884
    %1192 = vmatpush1.bf16.msra.mxu0 %v883
    %1193 = vmatprep.subr.bf16.mxu0 0
    %1194 = vmatpush2.bf16.msra.mxu0 0
    %1195 = vmatprep.subr.bf16.mxu0 0
    %1196 = vmatpush2.bf16.msra.mxu0 0
    %1197 = vmatprep.subr.bf16.mxu0 0
    %1198 = vmatpush2.bf16.msra.mxu0 0
    %1199 = vmatprep.subr.bf16.mxu0 0
    %1200 = vmatpush2.bf16.msra.mxu0 0
    %1201 = vmatprep.subr.bf16.mxu0 0
    %1202 = vmatpush2.bf16.msra.mxu0 0
    %1203 = vmatprep.subr.bf16.mxu0 0
    %1204 = vmatpush2.bf16.msra.mxu0 0
    %1205 = vmatprep.subr.bf16.mxu0 0
    %1206 = vmatpush2.bf16.msra.mxu0 0
    %1207 = vmatprep.subr.bf16.mxu0 0
    %1208 = vmatpush2.bf16.msra.mxu0 0
    %1209 = vmatprep.mubr.bf16.mxu0 0
    %1210 = vmatmul.mubr.bf16.gmra.mxu0 %v1176
    %v1211 = vpop.f32.mrf.mxu0
    %v1212 = vadd.f32 0.0, %v1211
    %v1213 = vpop.f32.mrf.mxu0
    %v1214 = vadd.f32 0.0, %v1213
    %v1215 = vpop.f32.mrf.mxu0
    %v1216 = vpop.f32.mrf.mxu0
    %1217 = vdwg.mxu0
    %1218 = vmatprep.subr.bf16.mxu0 %v914
    %1219 = vmatpush1.bf16.msra.mxu0 %v913
    %1220 = vmatprep.subr.bf16.mxu0 %v910
    %1221 = vmatpush1.bf16.msra.mxu0 %v909
    %1222 = vmatprep.subr.bf16.mxu0 %v906
    %1223 = vmatpush1.bf16.msra.mxu0 %v905
    %1224 = vmatprep.subr.bf16.mxu0 %v902
    %1225 = vmatpush1.bf16.msra.mxu0 %v901
    %1226 = vmatprep.subr.bf16.mxu0 %v898
    %1227 = vmatpush1.bf16.msra.mxu0 %v897
    %1228 = vmatprep.subr.bf16.mxu0 %v894
    %1229 = vmatpush1.bf16.msra.mxu0 %v893
    %1230 = vmatprep.subr.bf16.mxu0 %v890
    %1231 = vmatpush1.bf16.msra.mxu0 %v889
    %1232 = vmatprep.subr.bf16.mxu0 %v886
    %1233 = vmatpush1.bf16.msra.mxu0 %v885
    %1234 = vmatprep.subr.bf16.mxu0 0
    %1235 = vmatpush2.bf16.msra.mxu0 0
    %1236 = vmatprep.subr.bf16.mxu0 0
    %1237 = vmatpush2.bf16.msra.mxu0 0
    %1238 = vmatprep.subr.bf16.mxu0 0
    %1239 = vmatpush2.bf16.msra.mxu0 0
    %1240 = vmatprep.subr.bf16.mxu0 0
    %1241 = vmatpush2.bf16.msra.mxu0 0
    %1242 = vmatprep.subr.bf16.mxu0 0
    %1243 = vmatpush2.bf16.msra.mxu0 0
    %1244 = vmatprep.subr.bf16.mxu0 0
    %1245 = vmatpush2.bf16.msra.mxu0 0
    %1246 = vmatprep.subr.bf16.mxu0 0
    %1247 = vmatpush2.bf16.msra.mxu0 0
    %1248 = vmatprep.subr.bf16.mxu0 0
    %1249 = vmatpush2.bf16.msra.mxu0 0
    %1250 = vmatprep.mubr.bf16.mxu0 0
    %1251 = vmatmul.mubr.bf16.gmra.mxu0 %v1176
    %v1252 = vpop.f32.mrf.mxu0
    %v1253 = vadd.f32 0.0, %v1252
    %v1254 = vpop.f32.mrf.mxu0
    %v1255 = vadd.f32 0.0, %v1254
    %v1256 = vpop.f32.mrf.mxu0
    %v1257 = vpop.f32.mrf.mxu0
    %1258 = vdwg.mxu0
    %v1259 = vadd.f32 %v1172, %v1212
    %v1260 = vadd.f32 %v1173, %v1214
    %v1261 = vadd.f32 %v1174, %v1253
    %v1262 = vadd.f32 %v1175, %v1255
    %v1263 = vmul.f32 %v1259, 0.5
    %v1264 = vtanh.pop %v1263
    %v1265 = vmul.f32 %v1264, 0.5
    %v1266 = vadd.f32 %v1265, 0.5
    %v1267 = vmul.f32 %v1260, 0.5
    %v1268 = vtanh.pop %v1267
    %v1269 = vmul.f32 %v1268, 0.5
    %v1270 = vadd.f32 %v1269, 0.5
    %v1271 = vtanh.pop %v1261
    %v1272 = vmul.f32 %v1262, 0.5
    %v1273 = vtanh.pop %v1272
    %v1274 = vmul.f32 %v1273, 0.5
    %v1275 = vadd.f32 %v1274, 0.5
    %v1276 = vmul.f32 %v1270, %v1171
    %v1277 = vmul.f32 %v1266, %v1271
    %v1278 = vadd.f32 %v1276, %v1277
    %v1279 = vtanh.pop %v1278
    %v1280 = vmul.f32 %v1275, %v1279
    %p1281 = scmp.gt.s32.totalorder %s75, 2
    %s1282 = scalar_select %p1281, 1, 0
    %v1283 = vstv %s1282
    %vm1284 = vcmp.eq.s32.totalorder %v1283, 1
    %v1285 = vsel %vm1284, %v1280, %v1170
    %v1286 = vsel %vm1284, %v1278, %v1171
    %v1287 = vld [vmem:[#allocation2 + $0x60] sm:$0xff]
    %v1288 = vld [vmem:[#allocation2 + $0x68] sm:$0xff]
    %v1289 = vld [vmem:[#allocation2 + $0x70] sm:$0xff]
    %v1290 = vld [vmem:[#allocation2 + $0x78] sm:$0xff]
    %v1291 = vpack.c.bf16 %v1285, %v1285
    %1292 = vmatprep.subr.bf16.mxu0 %v912
    %1293 = vmatpush1.bf16.msra.mxu0 %v911
    %1294 = vmatprep.subr.bf16.mxu0 %v908
    %1295 = vmatpush1.bf16.msra.mxu0 %v907
    %1296 = vmatprep.subr.bf16.mxu0 %v904
    %1297 = vmatpush1.bf16.msra.mxu0 %v903
    %1298 = vmatprep.subr.bf16.mxu0 %v900
    %1299 = vmatpush1.bf16.msra.mxu0 %v899
    %1300 = vmatprep.subr.bf16.mxu0 %v896
    %1301 = vmatpush1.bf16.msra.mxu0 %v895
    %1302 = vmatprep.subr.bf16.mxu0 %v892
    %1303 = vmatpush1.bf16.msra.mxu0 %v891
    %1304 = vmatprep.subr.bf16.mxu0 %v888
    %1305 = vmatpush1.bf16.msra.mxu0 %v887
    %1306 = vmatprep.subr.bf16.mxu0 %v884
    %1307 = vmatpush1.bf16.msra.mxu0 %v883
    %1308 = vmatprep.subr.bf16.mxu0 0
    %1309 = vmatpush2.bf16.msra.mxu0 0
    %1310 = vmatprep.subr.bf16.mxu0 0
    %1311 = vmatpush2.bf16.msra.mxu0 0
    %1312 = vmatprep.subr.bf16.mxu0 0
    %1313 = vmatpush2.bf16.msra.mxu0 0
    %1314 = vmatprep.subr.bf16.mxu0 0
    %1315 = vmatpush2.bf16.msra.mxu0 0
    %1316 = vmatprep.subr.bf16.mxu0 0
    %1317 = vmatpush2.bf16.msra.mxu0 0
    %1318 = vmatprep.subr.bf16.mxu0 0
    %1319 = vmatpush2.bf16.msra.mxu0 0
    %1320 = vmatprep.subr.bf16.mxu0 0
    %1321 = vmatpush2.bf16.msra.mxu0 0
    %1322 = vmatprep.subr.bf16.mxu0 0
    %1323 = vmatpush2.bf16.msra.mxu0 0
    %1324 = vmatprep.mubr.bf16.mxu0 0
    %1325 = vmatmul.mubr.bf16.gmra.mxu0 %v1291
    %v1326 = vpop.f32.mrf.mxu0
    %v1327 = vadd.f32 0.0, %v1326
    %v1328 = vpop.f32.mrf.mxu0
    %v1329 = vadd.f32 0.0, %v1328
    %v1330 = vpop.f32.mrf.mxu0
    %v1331 = vpop.f32.mrf.mxu0
    %1332 = vdwg.mxu0
    %1333 = vmatprep.subr.bf16.mxu0 %v914
    %1334 = vmatpush1.bf16.msra.mxu0 %v913
    %1335 = vmatprep.subr.bf16.mxu0 %v910
    %1336 = vmatpush1.bf16.msra.mxu0 %v909
    %1337 = vmatprep.subr.bf16.mxu0 %v906
    %1338 = vmatpush1.bf16.msra.mxu0 %v905
    %1339 = vmatprep.subr.bf16.mxu0 %v902
    %1340 = vmatpush1.bf16.msra.mxu0 %v901
    %1341 = vmatprep.subr.bf16.mxu0 %v898
    %1342 = vmatpush1.bf16.msra.mxu0 %v897
    %1343 = vmatprep.subr.bf16.mxu0 %v894
    %1344 = vmatpush1.bf16.msra.mxu0 %v893
    %1345 = vmatprep.subr.bf16.mxu0 %v890
    %1346 = vmatpush1.bf16.msra.mxu0 %v889
    %1347 = vmatprep.subr.bf16.mxu0 %v886
    %1348 = vmatpush1.bf16.msra.mxu0 %v885
    %1349 = vmatprep.subr.bf16.mxu0 0
    %1350 = vmatpush2.bf16.msra.mxu0 0
    %1351 = vmatprep.subr.bf16.mxu0 0
    %1352 = vmatpush2.bf16.msra.mxu0 0
    %1353 = vmatprep.subr.bf16.mxu0 0
    %1354 = vmatpush2.bf16.msra.mxu0 0
    %1355 = vmatprep.subr.bf16.mxu0 0
    %1356 = vmatpush2.bf16.msra.mxu0 0
    %1357 = vmatprep.subr.bf16.mxu0 0
    %1358 = vmatpush2.bf16.msra.mxu0 0
    %1359 = vmatprep.subr.bf16.mxu0 0
    %1360 = vmatpush2.bf16.msra.mxu0 0
    %1361 = vmatprep.subr.bf16.mxu0 0
    %1362 = vmatpush2.bf16.msra.mxu0 0
    %1363 = vmatprep.subr.bf16.mxu0 0
    %1364 = vmatpush2.bf16.msra.mxu0 0
    %1365 = vmatprep.mubr.bf16.mxu0 0
    %1366 = vmatmul.mubr.bf16.gmra.mxu0 %v1291
    %v1367 = vpop.f32.mrf.mxu0
    %v1368 = vadd.f32 0.0, %v1367
    %v1369 = vpop.f32.mrf.mxu0
    %v1370 = vadd.f32 0.0, %v1369
    %v1371 = vpop.f32.mrf.mxu0
    %v1372 = vpop.f32.mrf.mxu0
    %1373 = vdwg.mxu0
    %v1374 = vadd.f32 %v1287, %v1327
    %v1375 = vadd.f32 %v1288, %v1329
    %v1376 = vadd.f32 %v1289, %v1368
    %v1377 = vadd.f32 %v1290, %v1370
    %v1378 = vmul.f32 %v1374, 0.5
    %v1379 = vtanh.pop %v1378
    %v1380 = vmul.f32 %v1379, 0.5
    %v1381 = vadd.f32 %v1380, 0.5
    %v1382 = vmul.f32 %v1375, 0.5
    %v1383 = vtanh.pop %v1382
    %v1384 = vmul.f32 %v1383, 0.5
    %v1385 = vadd.f32 %v1384, 0.5
    %v1386 = vtanh.pop %v1376
    %v1387 = vmul.f32 %v1377, 0.5
    %v1388 = vtanh.pop %v1387
    %v1389 = vmul.f32 %v1388, 0.5
    %v1390 = vadd.f32 %v1389, 0.5
    %v1391 = vmul.f32 %v1385, %v1286
    %v1392 = vmul.f32 %v1381, %v1386
    %v1393 = vadd.f32 %v1391, %v1392
    %v1394 = vtanh.pop %v1393
    %v1395 = vmul.f32 %v1390, %v1394
    %p1396 = scmp.gt.s32.totalorder %s75, 3
    %s1397 = scalar_select %p1396, 1, 0
    %v1398 = vstv %s1397
    %vm1399 = vcmp.eq.s32.totalorder %v1398, 1
    %v1400 = vsel %vm1399, %v1395, %v1285
    %v1401 = vsel %vm1399, %v1393, %v1286
    %v1402 = vld [vmem:[#allocation2 + $0x80] sm:$0xff]
    %v1403 = vld [vmem:[#allocation2 + $0x88] sm:$0xff]
    %v1404 = vld [vmem:[#allocation2 + $0x90] sm:$0xff]
    %v1405 = vld [vmem:[#allocation2 + $0x98] sm:$0xff]
    %v1406 = vpack.c.bf16 %v1400, %v1400
    %1407 = vmatprep.subr.bf16.mxu0 %v912
    %1408 = vmatpush1.bf16.msra.mxu0 %v911
    %1409 = vmatprep.subr.bf16.mxu0 %v908
    %1410 = vmatpush1.bf16.msra.mxu0 %v907
    %1411 = vmatprep.subr.bf16.mxu0 %v904
    %1412 = vmatpush1.bf16.msra.mxu0 %v903
    %1413 = vmatprep.subr.bf16.mxu0 %v900
    %1414 = vmatpush1.bf16.msra.mxu0 %v899
    %1415 = vmatprep.subr.bf16.mxu0 %v896
    %1416 = vmatpush1.bf16.msra.mxu0 %v895
    %1417 = vmatprep.subr.bf16.mxu0 %v892
    %1418 = vmatpush1.bf16.msra.mxu0 %v891
    %1419 = vmatprep.subr.bf16.mxu0 %v888
    %1420 = vmatpush1.bf16.msra.mxu0 %v887
    %1421 = vmatprep.subr.bf16.mxu0 %v884
    %1422 = vmatpush1.bf16.msra.mxu0 %v883
    %1423 = vmatprep.subr.bf16.mxu0 0
    %1424 = vmatpush2.bf16.msra.mxu0 0
    %1425 = vmatprep.subr.bf16.mxu0 0
    %1426 = vmatpush2.bf16.msra.mxu0 0
    %1427 = vmatprep.subr.bf16.mxu0 0
    %1428 = vmatpush2.bf16.msra.mxu0 0
    %1429 = vmatprep.subr.bf16.mxu0 0
    %1430 = vmatpush2.bf16.msra.mxu0 0
    %1431 = vmatprep.subr.bf16.mxu0 0
    %1432 = vmatpush2.bf16.msra.mxu0 0
    %1433 = vmatprep.subr.bf16.mxu0 0
    %1434 = vmatpush2.bf16.msra.mxu0 0
    %1435 = vmatprep.subr.bf16.mxu0 0
    %1436 = vmatpush2.bf16.msra.mxu0 0
    %1437 = vmatprep.subr.bf16.mxu0 0
    %1438 = vmatpush2.bf16.msra.mxu0 0
    %1439 = vmatprep.mubr.bf16.mxu0 0
    %1440 = vmatmul.mubr.bf16.gmra.mxu0 %v1406
    %v1441 = vpop.f32.mrf.mxu0
    %v1442 = vadd.f32 0.0, %v1441
    %v1443 = vpop.f32.mrf.mxu0
    %v1444 = vadd.f32 0.0, %v1443
    %v1445 = vpop.f32.mrf.mxu0
    %v1446 = vpop.f32.mrf.mxu0
    %1447 = vdwg.mxu0
    %1448 = vmatprep.subr.bf16.mxu0 %v914
    %1449 = vmatpush1.bf16.msra.mxu0 %v913
    %1450 = vmatprep.subr.bf16.mxu0 %v910
    %1451 = vmatpush1.bf16.msra.mxu0 %v909
    %1452 = vmatprep.subr.bf16.mxu0 %v906
    %1453 = vmatpush1.bf16.msra.mxu0 %v905
    %1454 = vmatprep.subr.bf16.mxu0 %v902
    %1455 = vmatpush1.bf16.msra.mxu0 %v901
    %1456 = vmatprep.subr.bf16.mxu0 %v898
    %1457 = vmatpush1.bf16.msra.mxu0 %v897
    %1458 = vmatprep.subr.bf16.mxu0 %v894
    %1459 = vmatpush1.bf16.msra.mxu0 %v893
    %1460 = vmatprep.subr.bf16.mxu0 %v890
    %1461 = vmatpush1.bf16.msra.mxu0 %v889
    %1462 = vmatprep.subr.bf16.mxu0 %v886
    %1463 = vmatpush1.bf16.msra.mxu0 %v885
    %1464 = vmatprep.subr.bf16.mxu0 0
    %1465 = vmatpush2.bf16.msra.mxu0 0
    %1466 = vmatprep.subr.bf16.mxu0 0
    %1467 = vmatpush2.bf16.msra.mxu0 0
    %1468 = vmatprep.subr.bf16.mxu0 0
    %1469 = vmatpush2.bf16.msra.mxu0 0
    %1470 = vmatprep.subr.bf16.mxu0 0
    %1471 = vmatpush2.bf16.msra.mxu0 0
    %1472 = vmatprep.subr.bf16.mxu0 0
    %1473 = vmatpush2.bf16.msra.mxu0 0
    %1474 = vmatprep.subr.bf16.mxu0 0
    %1475 = vmatpush2.bf16.msra.mxu0 0
    %1476 = vmatprep.subr.bf16.mxu0 0
    %1477 = vmatpush2.bf16.msra.mxu0 0
    %1478 = vmatprep.subr.bf16.mxu0 0
    %1479 = vmatpush2.bf16.msra.mxu0 0
    %1480 = vmatprep.mubr.bf16.mxu0 0
    %1481 = vmatmul.mubr.bf16.gmra.mxu0 %v1406
    %v1482 = vpop.f32.mrf.mxu0
    %v1483 = vadd.f32 0.0, %v1482
    %v1484 = vpop.f32.mrf.mxu0
    %v1485 = vadd.f32 0.0, %v1484
    %v1486 = vpop.f32.mrf.mxu0
    %v1487 = vpop.f32.mrf.mxu0
    %1488 = vdwg.mxu0
    %v1489 = vadd.f32 %v1402, %v1442
    %v1490 = vadd.f32 %v1403, %v1444
    %v1491 = vadd.f32 %v1404, %v1483
    %v1492 = vadd.f32 %v1405, %v1485
    %v1493 = vmul.f32 %v1489, 0.5
    %v1494 = vtanh.pop %v1493
    %v1495 = vmul.f32 %v1494, 0.5
    %v1496 = vadd.f32 %v1495, 0.5
    %v1497 = vmul.f32 %v1490, 0.5
    %v1498 = vtanh.pop %v1497
    %v1499 = vmul.f32 %v1498, 0.5
    %v1500 = vadd.f32 %v1499, 0.5
    %v1501 = vtanh.pop %v1491
    %v1502 = vmul.f32 %v1492, 0.5
    %v1503 = vtanh.pop %v1502
    %v1504 = vmul.f32 %v1503, 0.5
    %v1505 = vadd.f32 %v1504, 0.5
    %v1506 = vmul.f32 %v1500, %v1401
    %v1507 = vmul.f32 %v1496, %v1501
    %v1508 = vadd.f32 %v1506, %v1507
    %v1509 = vtanh.pop %v1508
    %v1510 = vmul.f32 %v1505, %v1509
    %p1511 = scmp.gt.s32.totalorder %s75, 4
    %s1512 = scalar_select %p1511, 1, 0
    %v1513 = vstv %s1512
    %vm1514 = vcmp.eq.s32.totalorder %v1513, 1
    %v1515 = vsel %vm1514, %v1510, %v1400
    %v1516 = vsel %vm1514, %v1508, %v1401
    %v1517 = vld [vmem:[#allocation2 + $0xa0] sm:$0xff]
    %v1518 = vld [vmem:[#allocation2 + $0xa8] sm:$0xff]
    %v1519 = vld [vmem:[#allocation2 + $0xb0] sm:$0xff]
    %v1520 = vld [vmem:[#allocation2 + $0xb8] sm:$0xff]
    %v1521 = vpack.c.bf16 %v1515, %v1515
    %1522 = vmatprep.subr.bf16.mxu0 %v912
    %1523 = vmatpush1.bf16.msra.mxu0 %v911
    %1524 = vmatprep.subr.bf16.mxu0 %v908
    %1525 = vmatpush1.bf16.msra.mxu0 %v907
    %1526 = vmatprep.subr.bf16.mxu0 %v904
    %1527 = vmatpush1.bf16.msra.mxu0 %v903
    %1528 = vmatprep.subr.bf16.mxu0 %v900
    %1529 = vmatpush1.bf16.msra.mxu0 %v899
    %1530 = vmatprep.subr.bf16.mxu0 %v896
    %1531 = vmatpush1.bf16.msra.mxu0 %v895
    %1532 = vmatprep.subr.bf16.mxu0 %v892
    %1533 = vmatpush1.bf16.msra.mxu0 %v891
    %1534 = vmatprep.subr.bf16.mxu0 %v888
    %1535 = vmatpush1.bf16.msra.mxu0 %v887
    %1536 = vmatprep.subr.bf16.mxu0 %v884
    %1537 = vmatpush1.bf16.msra.mxu0 %v883
    %1538 = vmatprep.subr.bf16.mxu0 0
    %1539 = vmatpush2.bf16.msra.mxu0 0
    %1540 = vmatprep.subr.bf16.mxu0 0
    %1541 = vmatpush2.bf16.msra.mxu0 0
    %1542 = vmatprep.subr.bf16.mxu0 0
    %1543 = vmatpush2.bf16.msra.mxu0 0
    %1544 = vmatprep.subr.bf16.mxu0 0
    %1545 = vmatpush2.bf16.msra.mxu0 0
    %1546 = vmatprep.subr.bf16.mxu0 0
    %1547 = vmatpush2.bf16.msra.mxu0 0
    %1548 = vmatprep.subr.bf16.mxu0 0
    %1549 = vmatpush2.bf16.msra.mxu0 0
    %1550 = vmatprep.subr.bf16.mxu0 0
    %1551 = vmatpush2.bf16.msra.mxu0 0
    %1552 = vmatprep.subr.bf16.mxu0 0
    %1553 = vmatpush2.bf16.msra.mxu0 0
    %1554 = vmatprep.mubr.bf16.mxu0 0
    %1555 = vmatmul.mubr.bf16.gmra.mxu0 %v1521
    %v1556 = vpop.f32.mrf.mxu0
    %v1557 = vadd.f32 0.0, %v1556
    %v1558 = vpop.f32.mrf.mxu0
    %v1559 = vadd.f32 0.0, %v1558
    %v1560 = vpop.f32.mrf.mxu0
    %v1561 = vpop.f32.mrf.mxu0
    %1562 = vdwg.mxu0
    %1563 = vmatprep.subr.bf16.mxu0 %v914
    %1564 = vmatpush1.bf16.msra.mxu0 %v913
    %1565 = vmatprep.subr.bf16.mxu0 %v910
    %1566 = vmatpush1.bf16.msra.mxu0 %v909
    %1567 = vmatprep.subr.bf16.mxu0 %v906
    %1568 = vmatpush1.bf16.msra.mxu0 %v905
    %1569 = vmatprep.subr.bf16.mxu0 %v902
    %1570 = vmatpush1.bf16.msra.mxu0 %v901
    %1571 = vmatprep.subr.bf16.mxu0 %v898
    %1572 = vmatpush1.bf16.msra.mxu0 %v897
    %1573 = vmatprep.subr.bf16.mxu0 %v894
    %1574 = vmatpush1.bf16.msra.mxu0 %v893
    %1575 = vmatprep.subr.bf16.mxu0 %v890
    %1576 = vmatpush1.bf16.msra.mxu0 %v889
    %1577 = vmatprep.subr.bf16.mxu0 %v886
    %1578 = vmatpush1.bf16.msra.mxu0 %v885
    %1579 = vmatprep.subr.bf16.mxu0 0
    %1580 = vmatpush2.bf16.msra.mxu0 0
    %1581 = vmatprep.subr.bf16.mxu0 0
    %1582 = vmatpush2.bf16.msra.mxu0 0
    %1583 = vmatprep.subr.bf16.mxu0 0
    %1584 = vmatpush2.bf16.msra.mxu0 0
    %1585 = vmatprep.subr.bf16.mxu0 0
    %1586 = vmatpush2.bf16.msra.mxu0 0
    %1587 = vmatprep.subr.bf16.mxu0 0
    %1588 = vmatpush2.bf16.msra.mxu0 0
    %1589 = vmatprep.subr.bf16.mxu0 0
    %1590 = vmatpush2.bf16.msra.mxu0 0
    %1591 = vmatprep.subr.bf16.mxu0 0
    %1592 = vmatpush2.bf16.msra.mxu0 0
    %1593 = vmatprep.subr.bf16.mxu0 0
    %1594 = vmatpush2.bf16.msra.mxu0 0
    %1595 = vmatprep.mubr.bf16.mxu0 0
    %1596 = vmatmul.mubr.bf16.gmra.mxu0 %v1521
    %v1597 = vpop.f32.mrf.mxu0
    %v1598 = vadd.f32 0.0, %v1597
    %v1599 = vpop.f32.mrf.mxu0
    %v1600 = vadd.f32 0.0, %v1599
    %v1601 = vpop.f32.mrf.mxu0
    %v1602 = vpop.f32.mrf.mxu0
    %1603 = vdwg.mxu0
    %v1604 = vadd.f32 %v1517, %v1557
    %v1605 = vadd.f32 %v1518, %v1559
    %v1606 = vadd.f32 %v1519, %v1598
    %v1607 = vadd.f32 %v1520, %v1600
    %v1608 = vmul.f32 %v1604, 0.5
    %v1609 = vtanh.pop %v1608
    %v1610 = vmul.f32 %v1609, 0.5
    %v1611 = vadd.f32 %v1610, 0.5
    %v1612 = vmul.f32 %v1605, 0.5
    %v1613 = vtanh.pop %v1612
    %v1614 = vmul.f32 %v1613, 0.5
    %v1615 = vadd.f32 %v1614, 0.5
    %v1616 = vtanh.pop %v1606
    %v1617 = vmul.f32 %v1607, 0.5
    %v1618 = vtanh.pop %v1617
    %v1619 = vmul.f32 %v1618, 0.5
    %v1620 = vadd.f32 %v1619, 0.5
    %v1621 = vmul.f32 %v1615, %v1516
    %v1622 = vmul.f32 %v1611, %v1616
    %v1623 = vadd.f32 %v1621, %v1622
    %v1624 = vtanh.pop %v1623
    %v1625 = vmul.f32 %v1620, %v1624
    %p1626 = scmp.gt.s32.totalorder %s75, 5
    %s1627 = scalar_select %p1626, 1, 0
    %v1628 = vstv %s1627
    %vm1629 = vcmp.eq.s32.totalorder %v1628, 1
    %v1630 = vsel %vm1629, %v1625, %v1515
    %v1631 = vsel %vm1629, %v1623, %v1516
    %v1632 = vld [vmem:[#allocation2 + $0xc0] sm:$0xff]
    %v1633 = vld [vmem:[#allocation2 + $0xc8] sm:$0xff]
    %v1634 = vld [vmem:[#allocation2 + $0xd0] sm:$0xff]
    %v1635 = vld [vmem:[#allocation2 + $0xd8] sm:$0xff]
    %v1636 = vpack.c.bf16 %v1630, %v1630
    %1637 = vmatprep.subr.bf16.mxu0 %v912
    %1638 = vmatpush1.bf16.msra.mxu0 %v911
    %1639 = vmatprep.subr.bf16.mxu0 %v908
    %1640 = vmatpush1.bf16.msra.mxu0 %v907
    %1641 = vmatprep.subr.bf16.mxu0 %v904
    %1642 = vmatpush1.bf16.msra.mxu0 %v903
    %1643 = vmatprep.subr.bf16.mxu0 %v900
    %1644 = vmatpush1.bf16.msra.mxu0 %v899
    %1645 = vmatprep.subr.bf16.mxu0 %v896
    %1646 = vmatpush1.bf16.msra.mxu0 %v895
    %1647 = vmatprep.subr.bf16.mxu0 %v892
    %1648 = vmatpush1.bf16.msra.mxu0 %v891
    %1649 = vmatprep.subr.bf16.mxu0 %v888
    %1650 = vmatpush1.bf16.msra.mxu0 %v887
    %1651 = vmatprep.subr.bf16.mxu0 %v884
    %1652 = vmatpush1.bf16.msra.mxu0 %v883
    %1653 = vmatprep.subr.bf16.mxu0 0
    %1654 = vmatpush2.bf16.msra.mxu0 0
    %1655 = vmatprep.subr.bf16.mxu0 0
    %1656 = vmatpush2.bf16.msra.mxu0 0
    %1657 = vmatprep.subr.bf16.mxu0 0
    %1658 = vmatpush2.bf16.msra.mxu0 0
    %1659 = vmatprep.subr.bf16.mxu0 0
    %1660 = vmatpush2.bf16.msra.mxu0 0
    %1661 = vmatprep.subr.bf16.mxu0 0
    %1662 = vmatpush2.bf16.msra.mxu0 0
    %1663 = vmatprep.subr.bf16.mxu0 0
    %1664 = vmatpush2.bf16.msra.mxu0 0
    %1665 = vmatprep.subr.bf16.mxu0 0
    %1666 = vmatpush2.bf16.msra.mxu0 0
    %1667 = vmatprep.subr.bf16.mxu0 0
    %1668 = vmatpush2.bf16.msra.mxu0 0
    %1669 = vmatprep.mubr.bf16.mxu0 0
    %1670 = vmatmul.mubr.bf16.gmra.mxu0 %v1636
    %v1671 = vpop.f32.mrf.mxu0
    %v1672 = vadd.f32 0.0, %v1671
    %v1673 = vpop.f32.mrf.mxu0
    %v1674 = vadd.f32 0.0, %v1673
    %v1675 = vpop.f32.mrf.mxu0
    %v1676 = vpop.f32.mrf.mxu0
    %1677 = vdwg.mxu0
    %1678 = vmatprep.subr.bf16.mxu0 %v914
    %1679 = vmatpush1.bf16.msra.mxu0 %v913
    %1680 = vmatprep.subr.bf16.mxu0 %v910
    %1681 = vmatpush1.bf16.msra.mxu0 %v909
    %1682 = vmatprep.subr.bf16.mxu0 %v906
    %1683 = vmatpush1.bf16.msra.mxu0 %v905
    %1684 = vmatprep.subr.bf16.mxu0 %v902
    %1685 = vmatpush1.bf16.msra.mxu0 %v901
    %1686 = vmatprep.subr.bf16.mxu0 %v898
    %1687 = vmatpush1.bf16.msra.mxu0 %v897
    %1688 = vmatprep.subr.bf16.mxu0 %v894
    %1689 = vmatpush1.bf16.msra.mxu0 %v893
    %1690 = vmatprep.subr.bf16.mxu0 %v890
    %1691 = vmatpush1.bf16.msra.mxu0 %v889
    %1692 = vmatprep.subr.bf16.mxu0 %v886
    %1693 = vmatpush1.bf16.msra.mxu0 %v885
    %1694 = vmatprep.subr.bf16.mxu0 0
    %1695 = vmatpush2.bf16.msra.mxu0 0
    %1696 = vmatprep.subr.bf16.mxu0 0
    %1697 = vmatpush2.bf16.msra.mxu0 0
    %1698 = vmatprep.subr.bf16.mxu0 0
    %1699 = vmatpush2.bf16.msra.mxu0 0
    %1700 = vmatprep.subr.bf16.mxu0 0
    %1701 = vmatpush2.bf16.msra.mxu0 0
    %1702 = vmatprep.subr.bf16.mxu0 0
    %1703 = vmatpush2.bf16.msra.mxu0 0
    %1704 = vmatprep.subr.bf16.mxu0 0
    %1705 = vmatpush2.bf16.msra.mxu0 0
    %1706 = vmatprep.subr.bf16.mxu0 0
    %1707 = vmatpush2.bf16.msra.mxu0 0
    %1708 = vmatprep.subr.bf16.mxu0 0
    %1709 = vmatpush2.bf16.msra.mxu0 0
    %1710 = vmatprep.mubr.bf16.mxu0 0
    %1711 = vmatmul.mubr.bf16.gmra.mxu0 %v1636
    %v1712 = vpop.f32.mrf.mxu0
    %v1713 = vadd.f32 0.0, %v1712
    %v1714 = vpop.f32.mrf.mxu0
    %v1715 = vadd.f32 0.0, %v1714
    %v1716 = vpop.f32.mrf.mxu0
    %v1717 = vpop.f32.mrf.mxu0
    %1718 = vdwg.mxu0
    %v1719 = vadd.f32 %v1632, %v1672
    %v1720 = vadd.f32 %v1633, %v1674
    %v1721 = vadd.f32 %v1634, %v1713
    %v1722 = vadd.f32 %v1635, %v1715
    %v1723 = vmul.f32 %v1719, 0.5
    %v1724 = vtanh.pop %v1723
    %v1725 = vmul.f32 %v1724, 0.5
    %v1726 = vadd.f32 %v1725, 0.5
    %v1727 = vmul.f32 %v1720, 0.5
    %v1728 = vtanh.pop %v1727
    %v1729 = vmul.f32 %v1728, 0.5
    %v1730 = vadd.f32 %v1729, 0.5
    %v1731 = vtanh.pop %v1721
    %v1732 = vmul.f32 %v1722, 0.5
    %v1733 = vtanh.pop %v1732
    %v1734 = vmul.f32 %v1733, 0.5
    %v1735 = vadd.f32 %v1734, 0.5
    %v1736 = vmul.f32 %v1730, %v1631
    %v1737 = vmul.f32 %v1726, %v1731
    %v1738 = vadd.f32 %v1736, %v1737
    %v1739 = vtanh.pop %v1738
    %v1740 = vmul.f32 %v1735, %v1739
    %p1741 = scmp.gt.s32.totalorder %s75, 6
    %s1742 = scalar_select %p1741, 1, 0
    %v1743 = vstv %s1742
    %vm1744 = vcmp.eq.s32.totalorder %v1743, 1
    %v1745 = vsel %vm1744, %v1740, %v1630
    %v1746 = vsel %vm1744, %v1738, %v1631
    %v1747 = vld [vmem:[#allocation2 + $0xe0] sm:$0xff]
    %v1748 = vld [vmem:[#allocation2 + $0xe8] sm:$0xff]
    %v1749 = vld [vmem:[#allocation2 + $0xf0] sm:$0xff]
    %v1750 = vld [vmem:[#allocation2 + $0xf8] sm:$0xff]
    %v1751 = vpack.c.bf16 %v1745, %v1745
    %1752 = vmatprep.subr.bf16.mxu0 %v912
    %1753 = vmatpush1.bf16.msra.mxu0 %v911
    %1754 = vmatprep.subr.bf16.mxu0 %v908
    %1755 = vmatpush1.bf16.msra.mxu0 %v907
    %1756 = vmatprep.subr.bf16.mxu0 %v904
    %1757 = vmatpush1.bf16.msra.mxu0 %v903
    %1758 = vmatprep.subr.bf16.mxu0 %v900
    %1759 = vmatpush1.bf16.msra.mxu0 %v899
    %1760 = vmatprep.subr.bf16.mxu0 %v896
    %1761 = vmatpush1.bf16.msra.mxu0 %v895
    %1762 = vmatprep.subr.bf16.mxu0 %v892
    %1763 = vmatpush1.bf16.msra.mxu0 %v891
    %1764 = vmatprep.subr.bf16.mxu0 %v888
    %1765 = vmatpush1.bf16.msra.mxu0 %v887
    %1766 = vmatprep.subr.bf16.mxu0 %v884
    %1767 = vmatpush1.bf16.msra.mxu0 %v883
    %1768 = vmatprep.subr.bf16.mxu0 0
    %1769 = vmatpush2.bf16.msra.mxu0 0
    %1770 = vmatprep.subr.bf16.mxu0 0
    %1771 = vmatpush2.bf16.msra.mxu0 0
    %1772 = vmatprep.subr.bf16.mxu0 0
    %1773 = vmatpush2.bf16.msra.mxu0 0
    %1774 = vmatprep.subr.bf16.mxu0 0
    %1775 = vmatpush2.bf16.msra.mxu0 0
    %1776 = vmatprep.subr.bf16.mxu0 0
    %1777 = vmatpush2.bf16.msra.mxu0 0
    %1778 = vmatprep.subr.bf16.mxu0 0
    %1779 = vmatpush2.bf16.msra.mxu0 0
    %1780 = vmatprep.subr.bf16.mxu0 0
    %1781 = vmatpush2.bf16.msra.mxu0 0
    %1782 = vmatprep.subr.bf16.mxu0 0
    %1783 = vmatpush2.bf16.msra.mxu0 0
    %1784 = vmatprep.mubr.bf16.mxu0 0
    %1785 = vmatmul.mubr.bf16.gmra.mxu0 %v1751
    %v1786 = vpop.f32.mrf.mxu0
    %v1787 = vadd.f32 0.0, %v1786
    %v1788 = vpop.f32.mrf.mxu0
    %v1789 = vadd.f32 0.0, %v1788
    %v1790 = vpop.f32.mrf.mxu0
    %v1791 = vpop.f32.mrf.mxu0
    %1792 = vdwg.mxu0
    %1793 = vmatprep.subr.bf16.mxu0 %v914
    %1794 = vmatpush1.bf16.msra.mxu0 %v913
    %1795 = vmatprep.subr.bf16.mxu0 %v910
    %1796 = vmatpush1.bf16.msra.mxu0 %v909
    %1797 = vmatprep.subr.bf16.mxu0 %v906
    %1798 = vmatpush1.bf16.msra.mxu0 %v905
    %1799 = vmatprep.subr.bf16.mxu0 %v902
    %1800 = vmatpush1.bf16.msra.mxu0 %v901
    %1801 = vmatprep.subr.bf16.mxu0 %v898
    %1802 = vmatpush1.bf16.msra.mxu0 %v897
    %1803 = vmatprep.subr.bf16.mxu0 %v894
    %1804 = vmatpush1.bf16.msra.mxu0 %v893
    %1805 = vmatprep.subr.bf16.mxu0 %v890
    %1806 = vmatpush1.bf16.msra.mxu0 %v889
    %1807 = vmatprep.subr.bf16.mxu0 %v886
    %1808 = vmatpush1.bf16.msra.mxu0 %v885
    %1809 = vmatprep.subr.bf16.mxu0 0
    %1810 = vmatpush2.bf16.msra.mxu0 0
    %1811 = vmatprep.subr.bf16.mxu0 0
    %1812 = vmatpush2.bf16.msra.mxu0 0
    %1813 = vmatprep.subr.bf16.mxu0 0
    %1814 = vmatpush2.bf16.msra.mxu0 0
    %1815 = vmatprep.subr.bf16.mxu0 0
    %1816 = vmatpush2.bf16.msra.mxu0 0
    %1817 = vmatprep.subr.bf16.mxu0 0
    %1818 = vmatpush2.bf16.msra.mxu0 0
    %1819 = vmatprep.subr.bf16.mxu0 0
    %1820 = vmatpush2.bf16.msra.mxu0 0
    %1821 = vmatprep.subr.bf16.mxu0 0
    %1822 = vmatpush2.bf16.msra.mxu0 0
    %1823 = vmatprep.subr.bf16.mxu0 0
    %1824 = vmatpush2.bf16.msra.mxu0 0
    %1825 = vmatprep.mubr.bf16.mxu0 0
    %1826 = vmatmul.mubr.bf16.gmra.mxu0 %v1751
    %v1827 = vpop.f32.mrf.mxu0
    %v1828 = vadd.f32 0.0, %v1827
    %v1829 = vpop.f32.mrf.mxu0
    %v1830 = vadd.f32 0.0, %v1829
    %v1831 = vpop.f32.mrf.mxu0
    %v1832 = vpop.f32.mrf.mxu0
    %1833 = vdwg.mxu0
    %v1834 = vadd.f32 %v1747, %v1787
    %v1835 = vadd.f32 %v1748, %v1789
    %v1836 = vadd.f32 %v1749, %v1828
    %v1837 = vadd.f32 %v1750, %v1830
    %v1838 = vmul.f32 %v1834, 0.5
    %v1839 = vtanh.pop %v1838
    %v1840 = vmul.f32 %v1839, 0.5
    %v1841 = vadd.f32 %v1840, 0.5
    %v1842 = vmul.f32 %v1835, 0.5
    %v1843 = vtanh.pop %v1842
    %v1844 = vmul.f32 %v1843, 0.5
    %v1845 = vadd.f32 %v1844, 0.5
    %v1846 = vtanh.pop %v1836
    %v1847 = vmul.f32 %v1837, 0.5
    %v1848 = vtanh.pop %v1847
    %v1849 = vmul.f32 %v1848, 0.5
    %v1850 = vadd.f32 %v1849, 0.5
    %v1851 = vmul.f32 %v1845, %v1746
    %v1852 = vmul.f32 %v1841, %v1846
    %v1853 = vadd.f32 %v1851, %v1852
    %v1854 = vtanh.pop %v1853
    %v1855 = vmul.f32 %v1850, %v1854
    %p1856 = scmp.gt.s32.totalorder %s75, 7
    %s1857 = scalar_select %p1856, 1, 0
    %v1858 = vstv %s1857
    %vm1859 = vcmp.eq.s32.totalorder %v1858, 1
    %v1860 = vsel %vm1859, %v1855, %v1745
    %v1861 = vld [vmem:[%s2] sm:$0xff]
    %1863 = vset.pattern.permute.xlu0 0
    %1864 = vperm.xlu0 %1863, %v1861
    %v1865 = vpop.permute.xlu0 %1864
    %v1867 = vmul.f32 %v1860, %v1865
    %v1868 = vpack.c.bf16 %v1867, %v1867
    %v1869 = vld [vmem:[#allocation9] sm:$0xff]
    %v1870 = vld [vmem:[#allocation9 + $0x8] sm:$0xf]
    %v1871 = vld [vmem:[#allocation9 + $0xc] sm:$0xff]
    %v1872 = vld [vmem:[#allocation9 + $0x14] sm:$0xf]
    %v1873 = vld [vmem:[#allocation9 + $0x18] sm:$0xff]
    %v1874 = vld [vmem:[#allocation9 + $0x20] sm:$0xf]
    %v1875 = vld [vmem:[#allocation9 + $0x24] sm:$0xff]
    %v1876 = vld [vmem:[#allocation9 + $0x2c] sm:$0xf]
    %v1877 = vld [vmem:[#allocation9 + $0x30] sm:$0xff]
    %v1878 = vld [vmem:[#allocation9 + $0x38] sm:$0xf]
    %v1879 = vld [vmem:[#allocation9 + $0x3c] sm:$0xff]
    %v1880 = vld [vmem:[#allocation9 + $0x44] sm:$0xf]
    %v1881 = vld [vmem:[#allocation9 + $0x48] sm:$0xff]
    %v1882 = vld [vmem:[#allocation9 + $0x50] sm:$0xf]
    %v1883 = vld [vmem:[#allocation9 + $0x54] sm:$0xff]
    %v1884 = vld [vmem:[#allocation9 + $0x5c] sm:$0xf]
    %v1885 = vld [vmem:[#allocation9 + $0x60] sm:$0xff]
    %v1886 = vld [vmem:[#allocation9 + $0x68] sm:$0xf]
    %v1887 = vld [vmem:[#allocation9 + $0x6c] sm:$0xff]
    %v1888 = vld [vmem:[#allocation9 + $0x74] sm:$0xf]
    %v1889 = vld [vmem:[#allocation9 + $0x78] sm:$0xff]
    %v1890 = vld [vmem:[#allocation9 + $0x80] sm:$0xf]
    %v1891 = vld [vmem:[#allocation9 + $0x84] sm:$0xff]
    %v1892 = vld [vmem:[#allocation9 + $0x8c] sm:$0xf]
    %v1893 = vld [vmem:[#allocation9 + $0x90] sm:$0xff]
    %v1894 = vld [vmem:[#allocation9 + $0x98] sm:$0xf]
    %v1895 = vld [vmem:[#allocation9 + $0x9c] sm:$0xff]
    %v1896 = vld [vmem:[#allocation9 + $0xa4] sm:$0xf]
    %v1897 = vld [vmem:[#allocation9 + $0xa8] sm:$0xff]
    %v1898 = vld [vmem:[#allocation9 + $0xb0] sm:$0xf]
    %v1899 = vld [vmem:[#allocation9 + $0xb4] sm:$0xff]
    %v1900 = vld [vmem:[#allocation9 + $0xbc] sm:$0xf]
    %v1901 = vld [vmem:[%s7] sm:$0x7]
    %v1903 = vlaneseq
    %v1904 = vshrl.u32 %v1903, 7
    %v1905 = vsub.s32 0, %v1904
    %v1906 = vrot.slane %v1901, %v1905
    %v1907 = vlaneseq
    %v1908 = vshrl.u32 %v1907, 7
    %v1909 = vsub.s32 1, %v1908
    %v1910 = vrot.slane %v1901, %v1909
    %v1911 = vlaneseq
    %v1912 = vshrl.u32 %v1911, 7
    %v1913 = vsub.s32 2, %v1912
    %v1914 = vrot.slane %v1901, %v1913
    %v1950 = vunpack.c.l.b16 %v1869
    %v1951 = vunpack.c.h.b16 %v1869
    %v1952 = vunpack.c.l.b16 %v1870
    %v1953 = vunpack.c.l.b16 %v1871
    %v1954 = vunpack.c.h.b16 %v1871
    %v1955 = vunpack.c.l.b16 %v1872
    %v1956 = vunpack.c.l.b16 %v1873
    %v1957 = vunpack.c.h.b16 %v1873
    %v1958 = vunpack.c.l.b16 %v1874
    %v1959 = vunpack.c.l.b16 %v1875
    %v1960 = vunpack.c.h.b16 %v1875
    %v1961 = vunpack.c.l.b16 %v1876
    %v1962 = vunpack.c.l.b16 %v1877
    %v1963 = vunpack.c.h.b16 %v1877
    %v1964 = vunpack.c.l.b16 %v1878
    %v1965 = vunpack.c.l.b16 %v1879
    %v1966 = vunpack.c.h.b16 %v1879
    %v1967 = vunpack.c.l.b16 %v1880
    %v1968 = vunpack.c.l.b16 %v1881
    %v1969 = vunpack.c.h.b16 %v1881
    %v1970 = vunpack.c.l.b16 %v1882
    %v1971 = vunpack.c.l.b16 %v1883
    %v1972 = vunpack.c.h.b16 %v1883
    %v1973 = vunpack.c.l.b16 %v1884
    %v1974 = vunpack.c.l.b16 %v1885
    %v1975 = vunpack.c.h.b16 %v1885
    %v1976 = vunpack.c.l.b16 %v1886
    %v1977 = vunpack.c.l.b16 %v1887
    %v1978 = vunpack.c.h.b16 %v1887
    %v1979 = vunpack.c.l.b16 %v1888
    %v1980 = vunpack.c.l.b16 %v1889
    %v1981 = vunpack.c.h.b16 %v1889
    %v1982 = vunpack.c.l.b16 %v1890
    %v1983 = vunpack.c.l.b16 %v1891
    %v1984 = vunpack.c.h.b16 %v1891
    %v1985 = vunpack.c.l.b16 %v1892
    %v1986 = vunpack.c.l.b16 %v1893
    %v1987 = vunpack.c.h.b16 %v1893
    %v1988 = vunpack.c.l.b16 %v1894
    %v1989 = vunpack.c.l.b16 %v1895
    %v1990 = vunpack.c.h.b16 %v1895
    %v1991 = vunpack.c.l.b16 %v1896
    %v1992 = vunpack.c.l.b16 %v1897
    %v1993 = vunpack.c.h.b16 %v1897
    %v1994 = vunpack.c.l.b16 %v1898
    %v1995 = vunpack.c.l.b16 %v1899
    %v1996 = vunpack.c.h.b16 %v1899
    %v1997 = vunpack.c.l.b16 %v1900
    %v1998 = vpack.c.b16 %v1953, %v1950
    %v1999 = vpack.c.b16 %v1954, %v1951
    %v2000 = vpack.c.b16 %v1955, %v1952
    %v2001 = vpack.c.b16 %v1959, %v1956
    %v2002 = vpack.c.b16 %v1960, %v1957
    %v2003 = vpack.c.b16 %v1961, %v1958
    %v2004 = vpack.c.b16 %v1965, %v1962
    %v2005 = vpack.c.b16 %v1966, %v1963
    %v2006 = vpack.c.b16 %v1967, %v1964
    %v2007 = vpack.c.b16 %v1971, %v1968
    %v2008 = vpack.c.b16 %v1972, %v1969
    %v2009 = vpack.c.b16 %v1973, %v1970
    %v2010 = vpack.c.b16 %v1977, %v1974
    %v2011 = vpack.c.b16 %v1978, %v1975
    %v2012 = vpack.c.b16 %v1979, %v1976
    %v2013 = vpack.c.b16 %v1983, %v1980
    %v2014 = vpack.c.b16 %v1984, %v1981
    %v2015 = vpack.c.b16 %v1985, %v1982
    %v2016 = vpack.c.b16 %v1989, %v1986
    %v2017 = vpack.c.b16 %v1990, %v1987
    %v2018 = vpack.c.b16 %v1991, %v1988
    %v2019 = vpack.c.b16 %v1995, %v1992
    %v2020 = vpack.c.b16 %v1996, %v1993
    %v2021 = vpack.c.b16 %v1997, %v1994
    %2046 = vmatprep.subr.bf16.mxu0 %v2020
    %2047 = vmatpush1.bf16.msra.mxu0 %v2019
    %2048 = vmatprep.subr.bf16.mxu0 %v2017
    %2049 = vmatpush1.bf16.msra.mxu0 %v2016
    %2050 = vmatprep.subr.bf16.mxu0 %v2014
    %2051 = vmatpush1.bf16.msra.mxu0 %v2013
    %2052 = vmatprep.subr.bf16.mxu0 %v2011
    %2053 = vmatpush1.bf16.msra.mxu0 %v2010
    %2054 = vmatprep.subr.bf16.mxu0 %v2008
    %2055 = vmatpush1.bf16.msra.mxu0 %v2007
    %2056 = vmatprep.subr.bf16.mxu0 %v2005
    %2057 = vmatpush1.bf16.msra.mxu0 %v2004
    %2058 = vmatprep.subr.bf16.mxu0 %v2002
    %2059 = vmatpush1.bf16.msra.mxu0 %v2001
    %2060 = vmatprep.subr.bf16.mxu0 %v1999
    %2061 = vmatpush1.bf16.msra.mxu0 %v1998
    %2062 = vmatprep.subr.bf16.mxu0 0
    %2063 = vmatpush2.bf16.msra.mxu0 0
    %2064 = vmatprep.subr.bf16.mxu0 0
    %2065 = vmatpush2.bf16.msra.mxu0 0
    %2066 = vmatprep.subr.bf16.mxu0 0
    %2067 = vmatpush2.bf16.msra.mxu0 0
    %2068 = vmatprep.subr.bf16.mxu0 0
    %2069 = vmatpush2.bf16.msra.mxu0 0
    %2070 = vmatprep.subr.bf16.mxu0 0
    %2071 = vmatpush2.bf16.msra.mxu0 0
    %2072 = vmatprep.subr.bf16.mxu0 0
    %2073 = vmatpush2.bf16.msra.mxu0 0
    %2074 = vmatprep.subr.bf16.mxu0 0
    %2075 = vmatpush2.bf16.msra.mxu0 0
    %2076 = vmatprep.subr.bf16.mxu0 0
    %2077 = vmatpush2.bf16.msra.mxu0 0
    %2078 = vmatprep.mubr.bf16.mxu0 0
    %2079 = vmatmul.mubr.bf16.gmra.mxu0 %v1868
    %v2080 = vpop.f32.mrf.mxu0
    %v2081 = vadd.f32 %v1906, %v2080
    %v2082 = vpop.f32.mrf.mxu0
    %v2083 = vadd.f32 %v1910, %v2082
    %v2084 = vpop.f32.mrf.mxu0
    %v2085 = vpop.f32.mrf.mxu0
    %2086 = vdwg.mxu0
    %2087 = vmatprep.subr.bf16.mxu0 0
    %2088 = vmatpush1.bf16.msra.mxu0 %v2021
    %2089 = vmatprep.subr.bf16.mxu0 0
    %2090 = vmatpush1.bf16.msra.mxu0 %v2018
    %2091 = vmatprep.subr.bf16.mxu0 0
    %2092 = vmatpush1.bf16.msra.mxu0 %v2015
    %2093 = vmatprep.subr.bf16.mxu0 0
    %2094 = vmatpush1.bf16.msra.mxu0 %v2012
    %2095 = vmatprep.subr.bf16.mxu0 0
    %2096 = vmatpush1.bf16.msra.mxu0 %v2009
    %2097 = vmatprep.subr.bf16.mxu0 0
    %2098 = vmatpush1.bf16.msra.mxu0 %v2006
    %2099 = vmatprep.subr.bf16.mxu0 0
    %2100 = vmatpush1.bf16.msra.mxu0 %v2003
    %2101 = vmatprep.subr.bf16.mxu0 0
    %2102 = vmatpush1.bf16.msra.mxu0 %v2000
    %2103 = vmatprep.subr.bf16.mxu0 0
    %2104 = vmatpush2.bf16.msra.mxu0 0
    %2105 = vmatprep.subr.bf16.mxu0 0
    %2106 = vmatpush2.bf16.msra.mxu0 0
    %2107 = vmatprep.subr.bf16.mxu0 0
    %2108 = vmatpush2.bf16.msra.mxu0 0
    %2109 = vmatprep.subr.bf16.mxu0 0
    %2110 = vmatpush2.bf16.msra.mxu0 0
    %2111 = vmatprep.subr.bf16.mxu0 0
    %2112 = vmatpush2.bf16.msra.mxu0 0
    %2113 = vmatprep.subr.bf16.mxu0 0
    %2114 = vmatpush2.bf16.msra.mxu0 0
    %2115 = vmatprep.subr.bf16.mxu0 0
    %2116 = vmatpush2.bf16.msra.mxu0 0
    %2117 = vmatprep.subr.bf16.mxu0 0
    %2118 = vmatpush2.bf16.msra.mxu0 0
    %2119 = vmatprep.mubr.bf16.mxu0 0
    %2120 = vmatmul.mubr.bf16.gmra.mxu0 %v1868
    %v2121 = vpop.f32.mrf.mxu0
    %v2122 = vadd.f32 %v1914, %v2121
    %v2123 = vpop.f32.mrf.mxu0
    %v2124 = vpop.f32.mrf.mxu0
    %v2125 = vpop.f32.mrf.mxu0
    %2126 = vdwg.mxu0
    %v2127 = vmax.f32 %v2081, %v2083
    %2128 = vmax.xlane.f32.xlu0 %v2127
    %v2129 = vpop.xlane.xlu0 %2128
    %v2130 = vsub.f32 %v2081, %v2129
    %v2131 = vsub.f32 %v2083, %v2129
    %v2132 = vmul.f32 %v2130, 1.442695
    %v2133 = vpow.pop %v2132
    %v2134 = vmul.f32 %v2131, 1.442695
    %v2135 = vpow.pop %v2134
    %v2136 = vadd.f32 %v2133, %v2135
    %2137 = vadd.xlane.f32.xlu0 %v2136
    %v2138 = vpop.xlane.xlu0 %2137
    %v2139 = vrcp.pop %v2138
    %v2140 = vmul.f32 %v2133, %v2139
    %v2141 = vmul.f32 %v2135, %v2139
    %2142 = vst [vmem:[#allocation10] sm:$0xff] %v2140
    %2143 = vst [vmem:[#allocation10 + $0x8] sm:$0xff] %v2141
    %vm2144 = vcmask 7168
    %2145 = vst.msk [vmem:[%s9] sm:$0xff] %vm2144, %v2122
    // Predicated region
    $region46: #{lstm_actor_critic.1} parent=1 // pred_check
      _
    $region47: #{lstm_actor_critic.1} parent=1 // pred_check_branch
      %2147 = sbr.rel (0) target = $region49
    $region48: #{lstm_actor_critic.1} parent=1 // pred_region
      %s2149 = ssub.s32 256, 256
      %2150 = vsyncadd [#allocation6], %s2149
      %s2152 = sshll.u32 [#allocation10], 4
      %s2153 = int_to_ptr.vmem [resolvable:$true] %s2152
      %2155 = dma.vmem_to_hbm [thread:$0]  %s2153, 256, %s8, [#allocation6]
    $region49: #{lstm_actor_critic.1} parent=1 // pred_fallthru
      _
    // Predicated region
    $region50: #{lstm_actor_critic.1} parent=1 // pred_check
      _
    $region51: #{lstm_actor_critic.1} parent=1 // pred_check_branch
      %2157 = sbr.rel (0) target = $region53
    $region52: #{lstm_actor_critic.1} parent=1 // pred_region
      _
    $region53: #{lstm_actor_critic.1} parent=1 // pred_fallthru
      _
    // Predicated region
    $region54: #{lstm_actor_critic.1} parent=1 // pred_check
      _
    $region55: #{lstm_actor_critic.1} parent=1 // pred_check_branch
      %2159 = sbr.rel (0) target = $region57
    $region56: #{lstm_actor_critic.1} parent=1 // pred_region
      %2160 = dma.done [#allocation6], 256
    $region57: #{lstm_actor_critic.1} parent=1 // pred_fallthru
      _
    // Predicated region
    $region58: #{lstm_actor_critic.1} parent=1 // pred_check
      _
    $region59: #{lstm_actor_critic.1} parent=1 // pred_check_branch
      %2162 = sbr.rel (0) target = $region61
    $region60: #{lstm_actor_critic.1} parent=1 // pred_region
      _
    $region61: #{lstm_actor_critic.1} parent=1 // pred_fallthru
      _
    %2163 = vsyncpa [#allocation5], 1
    %2164 = vsyncpa [#allocation8], 1
    %2165 = vsyncpa [#allocation6], 1

</llo_original>
